<compile_context>
chip_gen: v6e
topology: v6e:2x2x1
jax: 0.10.0
libtpu: 0.0.40
codegen_flags: <defaults>
</compile_context>

<pallas_src>
import jax
import jax.numpy as jnp
from jax.experimental import pallas as pl
from jax.experimental.pallas import tpu as pltpu

HIDDEN = 512


def critic_kernel(state_ref, action_ref,
                  w14s_ref, w14a_ref, w25_ref, w36_ref,
                  bh_ref, b36_ref,
                  q_ref):
    tb = q_ref.shape[0]

    # ---- layer 1, both heads fused along N (bf16 matmul, f32 accumulate) ----
    s16 = state_ref[...].astype(jnp.bfloat16)
    a16 = action_ref[...].astype(jnp.bfloat16)
    h14 = (jnp.dot(s16, w14s_ref[...], preferred_element_type=jnp.float32)
           + jnp.dot(a16, w14a_ref[...], preferred_element_type=jnp.float32)
           + bh_ref[0:1, :])
    h14 = jnp.maximum(h14, 0.0)                       # (tb, 2*HIDDEN), f32
    h = h14[:, :HIDDEN]                               # Q1 hidden
    g = h14[:, HIDDEN:]                               # Q2 hidden

    # ---- layer 2, per head (weights stacked in one (2, H, H) bf16 array) ----
    h2 = jnp.dot(h.astype(jnp.bfloat16), w25_ref[0],
                 preferred_element_type=jnp.float32) + bh_ref[1:2, :HIDDEN]
    g2 = jnp.dot(g.astype(jnp.bfloat16), w25_ref[1],
                 preferred_element_type=jnp.float32) + bh_ref[1:2, HIDDEN:]
    h2 = jnp.maximum(h2, 0.0)
    g2 = jnp.maximum(g2, 0.0)

    # ---- layer 3, both heads in a single MXU pass ----
    # stack the two heads along the batch (sublane) axis against W36=[w3|w6].
    hg = jnp.concatenate([h2, g2], axis=0).astype(jnp.bfloat16)      # (2*tb, H)
    out = jnp.dot(hg, w36_ref[...],
                  preferred_element_type=jnp.float32) + b36_ref[...]  # (2*tb, 2)
    # column 0 of the first tb rows = q1; column 1 of the last tb rows = q2.
    col = jax.lax.broadcasted_iota(jnp.int32, (tb, 2), 1)
    q_ref[...] = jnp.where(col == 0, out[:tb, :], out[tb:, :])


def critic_forward(state, action, packed, *, block_b=256):
    """Fused twin-Q forward. Returns (q1, q2), each (B, 1) float32."""
    B, state_dim = state.shape
    action_dim = action.shape[1]

    # Batch tile: multiple of the 8-sublane granule, capped at block_b.
    if B <= block_b:
        tb = ((B + 7) // 8) * 8
    else:
        tb = block_b
    b_pad = ((B + tb - 1) // tb) * tb
    if b_pad != B:
        state = jnp.pad(state, ((0, b_pad - B), (0, 0)))
        action = jnp.pad(action, ((0, b_pad - B), (0, 0)))

    def resident(arr):
        if arr.ndim == 2:
            return pl.BlockSpec(arr.shape, lambda i: (0, 0))
        return pl.BlockSpec(arr.shape, lambda i: (0, 0, 0))

    q = pl.pallas_call(
        critic_kernel,
        out_shape=jax.ShapeDtypeStruct((b_pad, 2), jnp.float32),
        grid=(b_pad // tb,),
        in_specs=[
            pl.BlockSpec((tb, state_dim), lambda i: (i, 0)),
            pl.BlockSpec((tb, action_dim), lambda i: (i, 0)),
            resident(packed["w14_s"]),
            resident(packed["w14_a"]),
            resident(packed["w25"]),
            resident(packed["w36"]),
            resident(packed["b_hidden"]),
            resident(packed["b36"]),
        ],
        out_specs=pl.BlockSpec((tb, 2), lambda i: (i, 0)),
        compiler_params=pltpu.CompilerParams(
            dimension_semantics=("parallel",)),
    )(state, action,
      packed["w14_s"], packed["w14_a"], packed["w25"], packed["w36"],
      packed["b_hidden"], packed["b36"])

    q1 = q[:B, 0:1]
    q2 = q[:B, 1:2]
    return q1, q2


def init_params(key, state_dim, action_dim):
    """PyTorch-Linear-style init, weights stored as (in, out) float32."""
    in_dim = state_dim + action_dim
    dims = [
        (in_dim, HIDDEN),   # l1
        (HIDDEN, HIDDEN),   # l2
        (HIDDEN, 1),        # l3
        (in_dim, HIDDEN),   # l4
        (HIDDEN, HIDDEN),   # l5
        (HIDDEN, 1),        # l6
    ]
    params = {}
    keys = jax.random.split(key, 2 * len(dims))
    for i, (fan_in, fan_out) in enumerate(dims):
        bound = 1.0 / jnp.sqrt(float(fan_in))
        params[f"w{i + 1}"] = jax.random.uniform(
            keys[2 * i], (fan_in, fan_out),
            minval=-bound, maxval=bound, dtype=jnp.float32)
        params[f"b{i + 1}"] = jax.random.uniform(
            keys[2 * i + 1], (1, fan_out),
            minval=-bound, maxval=bound, dtype=jnp.float32)
    return params


def prepare_params(params, state_dim, weight_dtype=jnp.bfloat16):
    """One-time packing of the torch-style params into kernel-friendly arrays.

    TODO(synk): on v6e/v5e the (2, 512, 512) block could be int8+scales for
    another 2x DMA cut; not portable to v7x (fp8-only MXU), so kept bf16 here.
    """
    w14 = jnp.concatenate([params["w1"], params["w4"]], axis=1)   # (in, 1024)
    packed = {
        "w14_s": w14[:state_dim].astype(weight_dtype),            # (S, 1024)
        "w14_a": w14[state_dim:].astype(weight_dtype),            # (A, 1024)
        "w25": jnp.stack([params["w2"], params["w5"]],
                         axis=0).astype(weight_dtype),            # (2, 512, 512)
        "w36": jnp.concatenate([params["w3"], params["w6"]],
                               axis=1).astype(weight_dtype),      # (512, 2)
        "b_hidden": jnp.concatenate(
            [jnp.concatenate([params["b1"], params["b4"]], axis=1),
             jnp.concatenate([params["b2"], params["b5"]], axis=1)],
            axis=0).astype(jnp.float32),                          # (2, 1024)
        "b36": jnp.concatenate([params["b3"], params["b6"]],
                               axis=1).astype(jnp.float32),       # (1, 2)
    }
    return packed


def reference_forward(state, action, params):
    """Plain-JAX f32 reference of the PyTorch forward for verification."""
    sa = jnp.concatenate([state, action], axis=1)
    h = jnp.maximum(sa @ params["w1"] + params["b1"], 0.0)
    h = jnp.maximum(h @ params["w2"] + params["b2"], 0.0)
    q1 = h @ params["w3"] + params["b3"]
    g = jnp.maximum(sa @ params["w4"] + params["b4"], 0.0)
    g = jnp.maximum(g @ params["w5"] + params["b5"], 0.0)
    q2 = g @ params["w6"] + params["b6"]
    return q1, q2


if __name__ == "__main__":
    # Small, deterministic example shapes (turtlebot-like env).
    batch = 8
    state_dim = 24
    action_dim = 2

    key = jax.random.PRNGKey(0)
    k_params, k_state, k_action = jax.random.split(key, 3)

    params = init_params(k_params, state_dim, action_dim)
    packed = prepare_params(params, state_dim)

    state = jax.random.normal(k_state, (batch, state_dim), dtype=jnp.float32)
    action = jax.random.normal(k_action, (batch, action_dim), dtype=jnp.float32)

    fwd = jax.jit(critic_forward)
    q1, q2 = fwd(state, action, packed)
    jax.block_until_ready((q1, q2))

    # Sanity check against the f32 plain-JAX reference (bf16 weights inside
    # the kernel -> loosened tolerance, f32 accumulation preserved).
    q1_ref, q2_ref = reference_forward(state, action, params)
    assert q1.shape == (batch, 1) and q2.shape == (batch, 1)
    assert jnp.allclose(q1, q1_ref, atol=2e-2, rtol=2e-2), \
        float(jnp.max(jnp.abs(q1 - q1_ref)))
    assert jnp.allclose(q2, q2_ref, atol=2e-2, rtol=2e-2), \
        float(jnp.max(jnp.abs(q2 - q2_ref)))

    print("KERNEL_OK")
</pallas_src>

<mosaic_0001>
module attributes {stable_mosaic.version = 11 : i64} {
  func.func @critic_kernel(%arg0: i32, %arg1: memref<8x24xf32, #tpu.memory_space<vmem>>, %arg2: memref<8x2xf32, #tpu.memory_space<vmem>>, %arg3: memref<24x1024xbf16, #tpu.memory_space<vmem>>, %arg4: memref<2x1024xbf16, #tpu.memory_space<vmem>>, %arg5: memref<2x512x512xbf16, #tpu.memory_space<vmem>>, %arg6: memref<512x2xbf16, #tpu.memory_space<vmem>>, %arg7: memref<2x1024xf32, #tpu.memory_space<vmem>>, %arg8: memref<1x2xf32, #tpu.memory_space<vmem>>, %arg9: memref<8x2xf32, #tpu.memory_space<vmem>>) attributes {dimension_semantics = [#tpu.dimension_semantics<parallel>], iteration_bounds = array<i64: 1>, scalar_prefetch = 0 : i64, scratch_operands = 0 : i64, tpu.core_type = #tpu.core_type<tc>, window_params = [{transform_indices = @transform_0, window_bounds = array<i64: 8, 24>}, {transform_indices = @transform_1, window_bounds = array<i64: 8, 2>}, {pipeline_mode = #tpu.pipeline_mode<synchronous>, transform_indices = @transform_2, window_bounds = array<i64: 24, 1024>}, {pipeline_mode = #tpu.pipeline_mode<synchronous>, transform_indices = @transform_3, window_bounds = array<i64: 2, 1024>}, {pipeline_mode = #tpu.pipeline_mode<synchronous>, transform_indices = @transform_4, window_bounds = array<i64: 2, 512, 512>}, {pipeline_mode = #tpu.pipeline_mode<synchronous>, transform_indices = @transform_5, window_bounds = array<i64: 512, 2>}, {pipeline_mode = #tpu.pipeline_mode<synchronous>, transform_indices = @transform_6, window_bounds = array<i64: 2, 1024>}, {pipeline_mode = #tpu.pipeline_mode<synchronous>, transform_indices = @transform_7, window_bounds = array<i64: 1, 2>}, {transform_indices = @transform_8, window_bounds = array<i64: 8, 2>}]} {
    %c0 = arith.constant 0 : index
    %c0_0 = arith.constant 0 : index
    %0 = vector.load %arg1[%c0, %c0_0] : memref<8x24xf32, #tpu.memory_space<vmem>>, vector<8x24xf32>
    %1 = arith.truncf %0 : vector<8x24xf32> to vector<8x24xbf16>
    %c0_1 = arith.constant 0 : index
    %c0_2 = arith.constant 0 : index
    %2 = vector.load %arg2[%c0_1, %c0_2] : memref<8x2xf32, #tpu.memory_space<vmem>>, vector<8x2xf32>
    %3 = arith.truncf %2 : vector<8x2xf32> to vector<8x2xbf16>
    %c0_3 = arith.constant 0 : index
    %c0_4 = arith.constant 0 : index
    %4 = vector.load %arg3[%c0_3, %c0_4] : memref<24x1024xbf16, #tpu.memory_space<vmem>>, vector<24x1024xbf16>
    %cst = arith.constant dense<0.000000e+00> : vector<8x1024xf32>
    %5 = tpu.matmul %1, %4, %cst {dimension_numbers = #tpu.dot_dimension_numbers<[1], [0], [0], [1], [0, 0, 1, 1], [], []>} : vector<8x24xbf16>, vector<24x1024xbf16>, vector<8x1024xf32> -> vector<8x1024xf32>
    %c0_5 = arith.constant 0 : index
    %c0_6 = arith.constant 0 : index
    %6 = vector.load %arg4[%c0_5, %c0_6] : memref<2x1024xbf16, #tpu.memory_space<vmem>>, vector<2x1024xbf16>
    %cst_7 = arith.constant dense<0.000000e+00> : vector<8x1024xf32>
    %7 = tpu.matmul %3, %6, %cst_7 {dimension_numbers = #tpu.dot_dimension_numbers<[1], [0], [0], [1], [0, 0, 1, 1], [], []>} : vector<8x2xbf16>, vector<2x1024xbf16>, vector<8x1024xf32> -> vector<8x1024xf32>
    %8 = arith.addf %5, %7 : vector<8x1024xf32>
    %c0_8 = arith.constant 0 : index
    %c0_9 = arith.constant 0 : index
    %9 = vector.load %arg7[%c0_8, %c0_9] : memref<2x1024xf32, #tpu.memory_space<vmem>>, vector<1x1024xf32>
    %10 = vector.broadcast %9 : vector<1x1024xf32> to vector<8x1024xf32>
    %11 = arith.addf %8, %10 : vector<8x1024xf32>
    %cst_10 = arith.constant 0.000000e+00 : f32
    %12 = vector.broadcast %cst_10 : f32 to vector<8x1024xf32>
    %13 = arith.maximumf %11, %12 : vector<8x1024xf32>
    %14 = vector.extract_strided_slice %13 {offsets = [0, 0], sizes = [8, 512], strides = [1, 1]} : vector<8x1024xf32> to vector<8x512xf32>
    %15 = vector.extract_strided_slice %13 {offsets = [0, 512], sizes = [8, 512], strides = [1, 1]} : vector<8x1024xf32> to vector<8x512xf32>
    %16 = arith.truncf %14 : vector<8x512xf32> to vector<8x512xbf16>
    %c0_11 = arith.constant 0 : index
    %c0_12 = arith.constant 0 : index
    %c0_13 = arith.constant 0 : index
    %17 = vector.load %arg5[%c0_11, %c0_12, %c0_13] : memref<2x512x512xbf16, #tpu.memory_space<vmem>>, vector<1x512x512xbf16>
    %18 = vector.shape_cast %17 : vector<1x512x512xbf16> to vector<512x512xbf16>
    %cst_14 = arith.constant dense<0.000000e+00> : vector<8x512xf32>
    %19 = tpu.matmul %16, %18, %cst_14 {dimension_numbers = #tpu.dot_dimension_numbers<[1], [0], [0], [1], [0, 0, 1, 1], [], []>} : vector<8x512xbf16>, vector<512x512xbf16>, vector<8x512xf32> -> vector<8x512xf32>
    %c1 = arith.constant 1 : index
    %c0_15 = arith.constant 0 : index
    %20 = vector.load %arg7[%c1, %c0_15] : memref<2x1024xf32, #tpu.memory_space<vmem>>, vector<1x512xf32>
    %21 = vector.broadcast %20 : vector<1x512xf32> to vector<8x512xf32>
    %22 = arith.addf %19, %21 : vector<8x512xf32>
    %23 = arith.truncf %15 : vector<8x512xf32> to vector<8x512xbf16>
    %c1_16 = arith.constant 1 : index
    %c0_17 = arith.constant 0 : index
    %c0_18 = arith.constant 0 : index
    %24 = vector.load %arg5[%c1_16, %c0_17, %c0_18] : memref<2x512x512xbf16, #tpu.memory_space<vmem>>, vector<1x512x512xbf16>
    %25 = vector.shape_cast %24 : vector<1x512x512xbf16> to vector<512x512xbf16>
    %cst_19 = arith.constant dense<0.000000e+00> : vector<8x512xf32>
    %26 = tpu.matmul %23, %25, %cst_19 {dimension_numbers = #tpu.dot_dimension_numbers<[1], [0], [0], [1], [0, 0, 1, 1], [], []>} : vector<8x512xbf16>, vector<512x512xbf16>, vector<8x512xf32> -> vector<8x512xf32>
    %c1_20 = arith.constant 1 : index
    %c512 = arith.constant 512 : index
    %27 = vector.load %arg7[%c1_20, %c512] : memref<2x1024xf32, #tpu.memory_space<vmem>>, vector<1x512xf32>
    %28 = vector.broadcast %27 : vector<1x512xf32> to vector<8x512xf32>
    %29 = arith.addf %26, %28 : vector<8x512xf32>
    %cst_21 = arith.constant 0.000000e+00 : f32
    %30 = vector.broadcast %cst_21 : f32 to vector<8x512xf32>
    %31 = arith.maximumf %22, %30 : vector<8x512xf32>
    %cst_22 = arith.constant 0.000000e+00 : f32
    %32 = vector.broadcast %cst_22 : f32 to vector<8x512xf32>
    %33 = arith.maximumf %29, %32 : vector<8x512xf32>
    %34 = tpu.concatenate %31, %33 in 0 : vector<8x512xf32>, vector<8x512xf32> -> vector<16x512xf32>
    %35 = arith.truncf %34 : vector<16x512xf32> to vector<16x512xbf16>
    %c0_23 = arith.constant 0 : index
    %c0_24 = arith.constant 0 : index
    %36 = vector.load %arg6[%c0_23, %c0_24] : memref<512x2xbf16, #tpu.memory_space<vmem>>, vector<512x2xbf16>
    %cst_25 = arith.constant dense<0.000000e+00> : vector<16x2xf32>
    %37 = tpu.matmul %35, %36, %cst_25 {dimension_numbers = #tpu.dot_dimension_numbers<[1], [0], [0], [1], [0, 0, 1, 1], [], []>} : vector<16x512xbf16>, vector<512x2xbf16>, vector<16x2xf32> -> vector<16x2xf32>
    %c0_26 = arith.constant 0 : index
    %c0_27 = arith.constant 0 : index
    %38 = vector.load %arg8[%c0_26, %c0_27] : memref<1x2xf32, #tpu.memory_space<vmem>>, vector<1x2xf32>
    %39 = vector.broadcast %38 : vector<1x2xf32> to vector<16x2xf32>
    %40 = arith.addf %37, %39 : vector<16x2xf32>
    %41 = tpu.iota {dimensions = array<i32: 1>} : vector<8x2xi32>
    %c0_i32 = arith.constant 0 : i32
    %42 = vector.broadcast %c0_i32 : i32 to vector<8x2xi32>
    %43 = arith.cmpi eq, %41, %42 : vector<8x2xi32>
    %44 = vector.extract_strided_slice %40 {offsets = [0, 0], sizes = [8, 2], strides = [1, 1]} : vector<16x2xf32> to vector<8x2xf32>
    %45 = vector.extract_strided_slice %40 {offsets = [8, 0], sizes = [8, 2], strides = [1, 1]} : vector<16x2xf32> to vector<8x2xf32>
    %46 = arith.select %43, %44, %45 : vector<8x2xi1>, vector<8x2xf32>
    %c0_28 = arith.constant 0 : index
    %c0_29 = arith.constant 0 : index
    %47 = vector.load %arg9[%c0_28, %c0_29] : memref<8x2xf32, #tpu.memory_space<vmem>>, vector<8x2xf32>
    tpu.vector_store %arg9[%c0_28, %c0_29], %46 {strides = array<i32>} : memref<8x2xf32, #tpu.memory_space<vmem>>, vector<8x2xf32>,
    return
  }
  func.func @transform_0(%arg0: i32) -> (i32, i32) {
    %c0_i32 = arith.constant 0 : i32
    %c0_i32_0 = arith.constant 0 : i32
    return %arg0, %c0_i32 : i32, i32
  }
  func.func @transform_1(%arg0: i32) -> (i32, i32) {
    %c0_i32 = arith.constant 0 : i32
    %c0_i32_0 = arith.constant 0 : i32
    return %arg0, %c0_i32 : i32, i32
  }
  func.func @transform_2(%arg0: i32) -> (i32, i32) {
    %c0_i32 = arith.constant 0 : i32
    %c0_i32_0 = arith.constant 0 : i32
    %c0_i32_1 = arith.constant 0 : i32
    return %c0_i32, %c0_i32_0 : i32, i32
  }
  func.func @transform_3(%arg0: i32) -> (i32, i32) {
    %c0_i32 = arith.constant 0 : i32
    %c0_i32_0 = arith.constant 0 : i32
    %c0_i32_1 = arith.constant 0 : i32
    return %c0_i32, %c0_i32_0 : i32, i32
  }
  func.func @transform_4(%arg0: i32) -> (i32, i32, i32) {
    %c0_i32 = arith.constant 0 : i32
    %c0_i32_0 = arith.constant 0 : i32
    %c0_i32_1 = arith.constant 0 : i32
    %c0_i32_2 = arith.constant 0 : i32
    return %c0_i32, %c0_i32_0, %c0_i32_1 : i32, i32, i32
  }
  func.func @transform_5(%arg0: i32) -> (i32, i32) {
    %c0_i32 = arith.constant 0 : i32
    %c0_i32_0 = arith.constant 0 : i32
    %c0_i32_1 = arith.constant 0 : i32
    return %c0_i32, %c0_i32_0 : i32, i32
  }
  func.func @transform_6(%arg0: i32) -> (i32, i32) {
    %c0_i32 = arith.constant 0 : i32
    %c0_i32_0 = arith.constant 0 : i32
    %c0_i32_1 = arith.constant 0 : i32
    return %c0_i32, %c0_i32_0 : i32, i32
  }
  func.func @transform_7(%arg0: i32) -> (i32, i32) {
    %c0_i32 = arith.constant 0 : i32
    %c0_i32_0 = arith.constant 0 : i32
    %c0_i32_1 = arith.constant 0 : i32
    return %c0_i32, %c0_i32_0 : i32, i32
  }
  func.func @transform_8(%arg0: i32) -> (i32, i32) {
    %c0_i32 = arith.constant 0 : i32
    %c0_i32_0 = arith.constant 0 : i32
    return %arg0, %c0_i32 : i32, i32
  }
}

</mosaic_0001>

<llo_original>
// kernel: critic_forward.1
$region0: #{critic_forward.1}
  #allocation0 [shape = 'u32[]', space=smem, size = 0x4, offset = 0x4, fixed_abs, tag = 'smem constant byte address 0x4 - core index']
  #allocation1 [shape = 'u32[144,128]{1,0:T(1,128)}', space=vmem, size = 0x12000, scoped, tag = 'internal scratch']
  %s0 = inlined_call_operand.vmem [shape: f32[8,24], index: 0, kind: input, shape index: {}]
  %s1 = inlined_call_operand.vmem [shape: f32[8,2], index: 1, kind: input, shape index: {}]
  %s2 = inlined_call_operand.vmem [shape: bf16[24,1024], index: 2, kind: input, shape index: {}]
  %s3 = inlined_call_operand.vmem [shape: bf16[2,1024], index: 3, kind: input, shape index: {}]
  %s4 = inlined_call_operand.hbm [shape: bf16[2,512,512], index: 4, kind: input, shape index: {}]
  %s5 = inlined_call_operand.vmem [shape: bf16[512,2], index: 5, kind: input, shape index: {}]
  %s6 = inlined_call_operand.vmem [shape: f32[2,1024], index: 6, kind: input, shape index: {}]
  %s7 = inlined_call_operand.vmem [shape: f32[1,2], index: 7, kind: input, shape index: {}]
  %s8 = inlined_call_operand.vmem [shape: f32[8,2], index: 8, kind: output, shape index: {}]
  %s9 = sld [smem:[#allocation0]]
  $region46: #{critic_forward.1} parent=0
    _
  %s11 = ssub.s32 1, %s9
  %s12 = scalar_select 0, %s11, %s9
  $region1: #{critic_forward.1} parent=0
    #allocation2 [shape = 'u8[1048576]{0}', space=vmem, size = 0x100000, scoped, tag = 'input window, operand 4, single buffered']
    #allocation3 [shape = 's32[1]{0}', space=sflag, size = 0x4, scoped, tag = 'scoped memory for critic_forward.1']
    %13 = vsyncpa [#allocation3], 0
    // Predicated region
    $region2: #{critic_forward.1} parent=1 // pred_check
      _
    $region3: #{critic_forward.1} parent=1 // pred_check_branch
      %15 = sbr.rel (0) target = $region5
    $region4: #{critic_forward.1} parent=1 // pred_region
      _
    $region5: #{critic_forward.1} parent=1 // pred_fallthru
      _
    // Predicated region
    $region6: #{critic_forward.1} parent=1 // pred_check
      _
    $region7: #{critic_forward.1} parent=1 // pred_check_branch
      %17 = sbr.rel (0) target = $region9
    $region8: #{critic_forward.1} parent=1 // pred_region
      _
    $region9: #{critic_forward.1} parent=1 // pred_fallthru
      _
    // Predicated region
    $region10: #{critic_forward.1} parent=1 // pred_check
      _
    $region11: #{critic_forward.1} parent=1 // pred_check_branch
      %19 = sbr.rel (0) target = $region13
    $region12: #{critic_forward.1} parent=1 // pred_region
      _
    $region13: #{critic_forward.1} parent=1 // pred_fallthru
      _
    // Predicated region
    $region14: #{critic_forward.1} parent=1 // pred_check
      _
    $region15: #{critic_forward.1} parent=1 // pred_check_branch
      %21 = sbr.rel (0) target = $region17
    $region16: #{critic_forward.1} parent=1 // pred_region
      _
    $region17: #{critic_forward.1} parent=1 // pred_fallthru
      _
    // Predicated region
    $region18: #{critic_forward.1} parent=1 // pred_check
      _
    $region19: #{critic_forward.1} parent=1 // pred_check_branch
      %23 = sbr.rel (0) target = $region21
    $region20: #{critic_forward.1} parent=1 // pred_region
      %s25 = ssub.s32 32768, 32768
      %26 = vsyncadd [#allocation3], %s25
      %s27 = sshll.u32 [#allocation2], 4
      %s28 = int_to_ptr.vmem [resolvable:$true] %s27
      %33 = dma.hbm_to_vmem [thread:$0]  %s4, 32768, %s28, [#allocation3], 256, 256, 16
    $region21: #{critic_forward.1} parent=1 // pred_fallthru
      _
    // Predicated region
    $region22: #{critic_forward.1} parent=1 // pred_check
      _
    $region23: #{critic_forward.1} parent=1 // pred_check_branch
      %35 = sbr.rel (0) target = $region25
    $region24: #{critic_forward.1} parent=1 // pred_region
      _
    $region25: #{critic_forward.1} parent=1 // pred_fallthru
      _
    // Predicated region
    $region26: #{critic_forward.1} parent=1 // pred_check
      _
    $region27: #{critic_forward.1} parent=1 // pred_check_branch
      %37 = sbr.rel (0) target = $region29
    $region28: #{critic_forward.1} parent=1 // pred_region
      _
    $region29: #{critic_forward.1} parent=1 // pred_fallthru
      _
    // Predicated region
    $region30: #{critic_forward.1} parent=1 // pred_check
      _
    $region31: #{critic_forward.1} parent=1 // pred_check_branch
      %39 = sbr.rel (0) target = $region33
    $region32: #{critic_forward.1} parent=1 // pred_region
      _
    $region33: #{critic_forward.1} parent=1 // pred_fallthru
      _
    // Predicated region
    $region34: #{critic_forward.1} parent=1 // pred_check
      _
    $region35: #{critic_forward.1} parent=1 // pred_check_branch
      %41 = sbr.rel (0) target = $region37
    $region36: #{critic_forward.1} parent=1 // pred_region
      %42 = dma.done [#allocation3], 32768
    $region37: #{critic_forward.1} parent=1 // pred_fallthru
      _
    %v44 = vld [vmem:[%s0] sm:$0xff]
    %v45 = vpack.c.bf16 %v44, %v44
    %v46 = vld [vmem:[%s1] sm:$0xff]
    %v47 = vpack.c.bf16 %v46, %v46
    %v48 = vld [vmem:[%s2] sm:$0xff]
    %v49 = vld [vmem:[%s2 + $0x8] sm:$0xff]
    %v50 = vld [vmem:[%s2 + $0x10] sm:$0xff]
    %v51 = vld [vmem:[%s2 + $0x18] sm:$0xff]
    %v52 = vld [vmem:[%s2 + $0x20] sm:$0xff]
    %v53 = vld [vmem:[%s2 + $0x28] sm:$0xff]
    %v54 = vld [vmem:[%s2 + $0x30] sm:$0xff]
    %v55 = vld [vmem:[%s2 + $0x38] sm:$0xff]
    %v56 = vld [vmem:[%s2 + $0x40] sm:$0xff]
    %v57 = vld [vmem:[%s2 + $0x48] sm:$0xff]
    %v58 = vld [vmem:[%s2 + $0x50] sm:$0xff]
    %v59 = vld [vmem:[%s2 + $0x58] sm:$0xff]
    %v60 = vld [vmem:[%s3] sm:$0xff]
    %v62 = vcombine.high %v60, %v60
    %v64 = vunpack.c.l.s4 1966171168
    %v65 = vunpack.c.0.s8 %v64
    %v66 = vlaneseq
    %v67 = vshrl.u32 %v66, 7
    %v68 = vsub.s32 %v65, %v67
    %v69 = vrot.slane %v60, %v68
    %v71 = vunpack.c.l.s4 1966171168
    %v72 = vunpack.c.0.s8 %v71
    %v73 = vlaneseq
    %v74 = vshrl.u32 %v73, 7
    %v75 = vsub.s32 %v72, %v74
    %v76 = vrot.slane %v62, %v75
    %v77 = vcombine.high %v69, %v69
    %v78 = vcombine.high %v76, %v76
    %v80 = vunpack.c.l.s4 1966171168
    %v81 = vunpack.c.0.s8 %v80
    %v82 = vlaneseq
    %v83 = vshrl.u32 %v82, 7
    %v84 = vsub.s32 %v81, %v83
    %v85 = vrot.slane %v69, %v84
    %v87 = vunpack.c.l.s4 1966171168
    %v88 = vunpack.c.0.s8 %v87
    %v89 = vlaneseq
    %v90 = vshrl.u32 %v89, 7
    %v91 = vsub.s32 %v88, %v90
    %v92 = vrot.slane %v76, %v91
    %v94 = vunpack.c.l.s4 1966171168
    %v95 = vunpack.c.0.s8 %v94
    %v96 = vlaneseq
    %v97 = vshrl.u32 %v96, 7
    %v98 = vsub.s32 %v95, %v97
    %v99 = vrot.slane %v77, %v98
    %v101 = vunpack.c.l.s4 1966171168
    %v102 = vunpack.c.0.s8 %v101
    %v103 = vlaneseq
    %v104 = vshrl.u32 %v103, 7
    %v105 = vsub.s32 %v102, %v104
    %v106 = vrot.slane %v78, %v105
    %v107 = vcombine.high %v85, %v85
    %v108 = vcombine.high %v92, %v92
    %v109 = vcombine.high %v99, %v99
    %v110 = vcombine.high %v106, %v106
    %vm111 = vcmask 15360
    %v113 = vsel %vm111, %v47, 0
    %vm115 = vcmask 1040384
    %v117 = vsel %vm115, %v85, 0
    %v120 = vsel %vm115, %v99, 0
    %v123 = vsel %vm115, %v107, 0
    %v126 = vsel %vm115, %v109, 0
    %v129 = vsel %vm115, %v92, 0
    %v132 = vsel %vm115, %v106, 0
    %v135 = vsel %vm115, %v108, 0
    %v138 = vsel %vm115, %v110, 0
    %140 = vmatprep.subr.bf16.mxu0 0
    %141 = vmatpush1.bf16.msra.mxu0 0
    %142 = vmatprep.subr.bf16.mxu0 0
    %143 = vmatpush1.bf16.msra.mxu0 0
    %144 = vmatprep.subr.bf16.mxu0 0
    %145 = vmatpush1.bf16.msra.mxu0 0
    %146 = vmatprep.subr.bf16.mxu0 0
    %147 = vmatpush1.bf16.msra.mxu0 0
    %148 = vmatprep.subr.bf16.mxu0 0
    %149 = vmatpush1.bf16.msra.mxu0 0
    %150 = vmatprep.subr.bf16.mxu0 0
    %151 = vmatpush1.bf16.msra.mxu0 0
    %152 = vmatprep.subr.bf16.mxu0 0
    %153 = vmatpush1.bf16.msra.mxu0 0
    %154 = vmatprep.subr.bf16.mxu0 %v120
    %155 = vmatpush1.bf16.msra.mxu0 %v117
    %156 = vmatprep.subr.bf16.mxu0 0
    %157 = vmatpush2.bf16.msra.mxu0 0
    %158 = vmatprep.subr.bf16.mxu0 0
    %159 = vmatpush2.bf16.msra.mxu0 0
    %160 = vmatprep.subr.bf16.mxu0 0
    %161 = vmatpush2.bf16.msra.mxu0 0
    %162 = vmatprep.subr.bf16.mxu0 0
    %163 = vmatpush2.bf16.msra.mxu0 0
    %164 = vmatprep.subr.bf16.mxu0 0
    %165 = vmatpush2.bf16.msra.mxu0 0
    %166 = vmatprep.subr.bf16.mxu0 0
    %167 = vmatpush2.bf16.msra.mxu0 0
    %168 = vmatprep.subr.bf16.mxu0 0
    %169 = vmatpush2.bf16.msra.mxu0 0
    %170 = vmatprep.subr.bf16.mxu0 0
    %171 = vmatpush2.bf16.msra.mxu0 0
    %172 = vmatprep.mubr.bf16.mxu0 0
    %173 = vmatmul.mubr.bf16.gmra.mxu0 %v113
    %v174 = vpop.f32.mrf.mxu0
    %v175 = vadd.f32 0.0, %v174
    %v176 = vpop.f32.mrf.mxu0
    %v177 = vadd.f32 0.0, %v176
    %v178 = vpop.f32.mrf.mxu0
    %v179 = vpop.f32.mrf.mxu0
    %180 = vdwg.mxu0
    %181 = vmatprep.subr.bf16.mxu0 0
    %182 = vmatpush1.bf16.msra.mxu0 0
    %183 = vmatprep.subr.bf16.mxu0 0
    %184 = vmatpush1.bf16.msra.mxu0 0
    %185 = vmatprep.subr.bf16.mxu0 0
    %186 = vmatpush1.bf16.msra.mxu0 0
    %187 = vmatprep.subr.bf16.mxu0 0
    %188 = vmatpush1.bf16.msra.mxu0 0
    %189 = vmatprep.subr.bf16.mxu0 0
    %190 = vmatpush1.bf16.msra.mxu0 0
    %191 = vmatprep.subr.bf16.mxu0 0
    %192 = vmatpush1.bf16.msra.mxu0 0
    %193 = vmatprep.subr.bf16.mxu0 0
    %194 = vmatpush1.bf16.msra.mxu0 0
    %195 = vmatprep.subr.bf16.mxu0 %v126
    %196 = vmatpush1.bf16.msra.mxu0 %v123
    %197 = vmatprep.subr.bf16.mxu0 0
    %198 = vmatpush2.bf16.msra.mxu0 0
    %199 = vmatprep.subr.bf16.mxu0 0
    %200 = vmatpush2.bf16.msra.mxu0 0
    %201 = vmatprep.subr.bf16.mxu0 0
    %202 = vmatpush2.bf16.msra.mxu0 0
    %203 = vmatprep.subr.bf16.mxu0 0
    %204 = vmatpush2.bf16.msra.mxu0 0
    %205 = vmatprep.subr.bf16.mxu0 0
    %206 = vmatpush2.bf16.msra.mxu0 0
    %207 = vmatprep.subr.bf16.mxu0 0
    %208 = vmatpush2.bf16.msra.mxu0 0
    %209 = vmatprep.subr.bf16.mxu0 0
    %210 = vmatpush2.bf16.msra.mxu0 0
    %211 = vmatprep.subr.bf16.mxu0 0
    %212 = vmatpush2.bf16.msra.mxu0 0
    %213 = vmatprep.mubr.bf16.mxu0 0
    %214 = vmatmul.mubr.bf16.gmra.mxu0 %v113
    %v215 = vpop.f32.mrf.mxu0
    %v216 = vadd.f32 0.0, %v215
    %v217 = vpop.f32.mrf.mxu0
    %v218 = vadd.f32 0.0, %v217
    %v219 = vpop.f32.mrf.mxu0
    %v220 = vpop.f32.mrf.mxu0
    %221 = vdwg.mxu0
    %222 = vmatprep.subr.bf16.mxu0 0
    %223 = vmatpush1.bf16.msra.mxu0 0
    %224 = vmatprep.subr.bf16.mxu0 0
    %225 = vmatpush1.bf16.msra.mxu0 0
    %226 = vmatprep.subr.bf16.mxu0 0
    %227 = vmatpush1.bf16.msra.mxu0 0
    %228 = vmatprep.subr.bf16.mxu0 0
    %229 = vmatpush1.bf16.msra.mxu0 0
    %230 = vmatprep.subr.bf16.mxu0 0
    %231 = vmatpush1.bf16.msra.mxu0 0
    %232 = vmatprep.subr.bf16.mxu0 0
    %233 = vmatpush1.bf16.msra.mxu0 0
    %234 = vmatprep.subr.bf16.mxu0 0
    %235 = vmatpush1.bf16.msra.mxu0 0
    %236 = vmatprep.subr.bf16.mxu0 %v132
    %237 = vmatpush1.bf16.msra.mxu0 %v129
    %238 = vmatprep.subr.bf16.mxu0 0
    %239 = vmatpush2.bf16.msra.mxu0 0
    %240 = vmatprep.subr.bf16.mxu0 0
    %241 = vmatpush2.bf16.msra.mxu0 0
    %242 = vmatprep.subr.bf16.mxu0 0
    %243 = vmatpush2.bf16.msra.mxu0 0
    %244 = vmatprep.subr.bf16.mxu0 0
    %245 = vmatpush2.bf16.msra.mxu0 0
    %246 = vmatprep.subr.bf16.mxu0 0
    %247 = vmatpush2.bf16.msra.mxu0 0
    %248 = vmatprep.subr.bf16.mxu0 0
    %249 = vmatpush2.bf16.msra.mxu0 0
    %250 = vmatprep.subr.bf16.mxu0 0
    %251 = vmatpush2.bf16.msra.mxu0 0
    %252 = vmatprep.subr.bf16.mxu0 0
    %253 = vmatpush2.bf16.msra.mxu0 0
    %254 = vmatprep.mubr.bf16.mxu0 0
    %255 = vmatmul.mubr.bf16.gmra.mxu0 %v113
    %v256 = vpop.f32.mrf.mxu0
    %v257 = vadd.f32 0.0, %v256
    %v258 = vpop.f32.mrf.mxu0
    %v259 = vadd.f32 0.0, %v258
    %v260 = vpop.f32.mrf.mxu0
    %v261 = vpop.f32.mrf.mxu0
    %262 = vdwg.mxu0
    %263 = vmatprep.subr.bf16.mxu0 0
    %264 = vmatpush1.bf16.msra.mxu0 0
    %265 = vmatprep.subr.bf16.mxu0 0
    %266 = vmatpush1.bf16.msra.mxu0 0
    %267 = vmatprep.subr.bf16.mxu0 0
    %268 = vmatpush1.bf16.msra.mxu0 0
    %269 = vmatprep.subr.bf16.mxu0 0
    %270 = vmatpush1.bf16.msra.mxu0 0
    %271 = vmatprep.subr.bf16.mxu0 0
    %272 = vmatpush1.bf16.msra.mxu0 0
    %273 = vmatprep.subr.bf16.mxu0 0
    %274 = vmatpush1.bf16.msra.mxu0 0
    %275 = vmatprep.subr.bf16.mxu0 0
    %276 = vmatpush1.bf16.msra.mxu0 0
    %277 = vmatprep.subr.bf16.mxu0 %v138
    %278 = vmatpush1.bf16.msra.mxu0 %v135
    %279 = vmatprep.subr.bf16.mxu0 0
    %280 = vmatpush2.bf16.msra.mxu0 0
    %281 = vmatprep.subr.bf16.mxu0 0
    %282 = vmatpush2.bf16.msra.mxu0 0
    %283 = vmatprep.subr.bf16.mxu0 0
    %284 = vmatpush2.bf16.msra.mxu0 0
    %285 = vmatprep.subr.bf16.mxu0 0
    %286 = vmatpush2.bf16.msra.mxu0 0
    %287 = vmatprep.subr.bf16.mxu0 0
    %288 = vmatpush2.bf16.msra.mxu0 0
    %289 = vmatprep.subr.bf16.mxu0 0
    %290 = vmatpush2.bf16.msra.mxu0 0
    %291 = vmatprep.subr.bf16.mxu0 0
    %292 = vmatpush2.bf16.msra.mxu0 0
    %293 = vmatprep.subr.bf16.mxu0 0
    %294 = vmatpush2.bf16.msra.mxu0 0
    %295 = vmatprep.mubr.bf16.mxu0 0
    %296 = vmatmul.mubr.bf16.gmra.mxu0 %v113
    %v297 = vpop.f32.mrf.mxu0
    %v298 = vadd.f32 0.0, %v297
    %v299 = vpop.f32.mrf.mxu0
    %v300 = vadd.f32 0.0, %v299
    %v301 = vpop.f32.mrf.mxu0
    %v302 = vpop.f32.mrf.mxu0
    %303 = vdwg.mxu0
    %v316 = vunpack.c.l.b16 %v48
    %v317 = vunpack.c.h.b16 %v48
    %v318 = vunpack.c.l.b16 %v49
    %v319 = vunpack.c.h.b16 %v49
    %v320 = vunpack.c.l.b16 %v50
    %v321 = vunpack.c.h.b16 %v50
    %v322 = vunpack.c.l.b16 %v51
    %v323 = vunpack.c.h.b16 %v51
    %v324 = vunpack.c.l.b16 %v52
    %v325 = vunpack.c.h.b16 %v52
    %v326 = vunpack.c.l.b16 %v53
    %v327 = vunpack.c.h.b16 %v53
    %v328 = vunpack.c.l.b16 %v54
    %v329 = vunpack.c.h.b16 %v54
    %v330 = vunpack.c.l.b16 %v55
    %v331 = vunpack.c.h.b16 %v55
    %v332 = vunpack.c.l.b16 %v56
    %v333 = vunpack.c.h.b16 %v56
    %v334 = vunpack.c.l.b16 %v57
    %v335 = vunpack.c.h.b16 %v57
    %v336 = vunpack.c.l.b16 %v58
    %v337 = vunpack.c.h.b16 %v58
    %v338 = vunpack.c.l.b16 %v59
    %v339 = vunpack.c.h.b16 %v59
    %v340 = vpack.c.b16 %v324, %v316
    %v341 = vpack.c.b16 %v325, %v317
    %v342 = vpack.c.b16 %v326, %v318
    %v343 = vpack.c.b16 %v327, %v319
    %v344 = vpack.c.b16 %v328, %v320
    %v345 = vpack.c.b16 %v329, %v321
    %v346 = vpack.c.b16 %v330, %v322
    %v347 = vpack.c.b16 %v331, %v323
    %v348 = vpack.c.b16 %v332, %v332
    %v349 = vpack.c.b16 %v333, %v333
    %v350 = vpack.c.b16 %v334, %v334
    %v351 = vpack.c.b16 %v335, %v335
    %v352 = vpack.c.b16 %v336, %v336
    %v353 = vpack.c.b16 %v337, %v337
    %v354 = vpack.c.b16 %v338, %v338
    %v355 = vpack.c.b16 %v339, %v339
    %vm364 = vcmask 195584
    %v366 = vsel %vm364, %v45, 0
    %vm368 = vcmask 1043456
    %v370 = vsel %vm368, %v348, 0
    %v373 = vsel %vm368, %v349, 0
    %v376 = vsel %vm368, %v350, 0
    %v379 = vsel %vm368, %v351, 0
    %v382 = vsel %vm368, %v352, 0
    %v385 = vsel %vm368, %v353, 0
    %v388 = vsel %vm368, %v354, 0
    %v391 = vsel %vm368, %v355, 0
    %393 = vmatprep.subr.bf16.mxu0 0
    %394 = vmatpush1.bf16.msra.mxu0 0
    %395 = vmatprep.subr.bf16.mxu0 0
    %396 = vmatpush1.bf16.msra.mxu0 0
    %397 = vmatprep.subr.bf16.mxu0 0
    %398 = vmatpush1.bf16.msra.mxu0 0
    %399 = vmatprep.subr.bf16.mxu0 0
    %400 = vmatpush1.bf16.msra.mxu0 0
    %401 = vmatprep.subr.bf16.mxu0 0
    %402 = vmatpush1.bf16.msra.mxu0 0
    %403 = vmatprep.subr.bf16.mxu0 0
    %404 = vmatpush1.bf16.msra.mxu0 0
    %405 = vmatprep.subr.bf16.mxu0 %v373
    %406 = vmatpush1.bf16.msra.mxu0 %v370
    %407 = vmatprep.subr.bf16.mxu0 %v341
    %408 = vmatpush1.bf16.msra.mxu0 %v340
    %409 = vmatprep.subr.bf16.mxu0 0
    %410 = vmatpush2.bf16.msra.mxu0 0
    %411 = vmatprep.subr.bf16.mxu0 0
    %412 = vmatpush2.bf16.msra.mxu0 0
    %413 = vmatprep.subr.bf16.mxu0 0
    %414 = vmatpush2.bf16.msra.mxu0 0
    %415 = vmatprep.subr.bf16.mxu0 0
    %416 = vmatpush2.bf16.msra.mxu0 0
    %417 = vmatprep.subr.bf16.mxu0 0
    %418 = vmatpush2.bf16.msra.mxu0 0
    %419 = vmatprep.subr.bf16.mxu0 0
    %420 = vmatpush2.bf16.msra.mxu0 0
    %421 = vmatprep.subr.bf16.mxu0 0
    %422 = vmatpush2.bf16.msra.mxu0 0
    %423 = vmatprep.subr.bf16.mxu0 0
    %424 = vmatpush2.bf16.msra.mxu0 0
    %425 = vmatprep.mubr.bf16.mxu0 0
    %426 = vmatmul.mubr.bf16.gmra.mxu0 %v366
    %v427 = vpop.f32.mrf.mxu0
    %v428 = vadd.f32 %v175, %v427
    %v429 = vpop.f32.mrf.mxu0
    %v430 = vadd.f32 %v177, %v429
    %v431 = vpop.f32.mrf.mxu0
    %v432 = vpop.f32.mrf.mxu0
    %433 = vdwg.mxu0
    %434 = vmatprep.subr.bf16.mxu0 0
    %435 = vmatpush1.bf16.msra.mxu0 0
    %436 = vmatprep.subr.bf16.mxu0 0
    %437 = vmatpush1.bf16.msra.mxu0 0
    %438 = vmatprep.subr.bf16.mxu0 0
    %439 = vmatpush1.bf16.msra.mxu0 0
    %440 = vmatprep.subr.bf16.mxu0 0
    %441 = vmatpush1.bf16.msra.mxu0 0
    %442 = vmatprep.subr.bf16.mxu0 0
    %443 = vmatpush1.bf16.msra.mxu0 0
    %444 = vmatprep.subr.bf16.mxu0 0
    %445 = vmatpush1.bf16.msra.mxu0 0
    %446 = vmatprep.subr.bf16.mxu0 %v379
    %447 = vmatpush1.bf16.msra.mxu0 %v376
    %448 = vmatprep.subr.bf16.mxu0 %v343
    %449 = vmatpush1.bf16.msra.mxu0 %v342
    %450 = vmatprep.subr.bf16.mxu0 0
    %451 = vmatpush2.bf16.msra.mxu0 0
    %452 = vmatprep.subr.bf16.mxu0 0
    %453 = vmatpush2.bf16.msra.mxu0 0
    %454 = vmatprep.subr.bf16.mxu0 0
    %455 = vmatpush2.bf16.msra.mxu0 0
    %456 = vmatprep.subr.bf16.mxu0 0
    %457 = vmatpush2.bf16.msra.mxu0 0
    %458 = vmatprep.subr.bf16.mxu0 0
    %459 = vmatpush2.bf16.msra.mxu0 0
    %460 = vmatprep.subr.bf16.mxu0 0
    %461 = vmatpush2.bf16.msra.mxu0 0
    %462 = vmatprep.subr.bf16.mxu0 0
    %463 = vmatpush2.bf16.msra.mxu0 0
    %464 = vmatprep.subr.bf16.mxu0 0
    %465 = vmatpush2.bf16.msra.mxu0 0
    %466 = vmatprep.mubr.bf16.mxu0 0
    %467 = vmatmul.mubr.bf16.gmra.mxu0 %v366
    %v468 = vpop.f32.mrf.mxu0
    %v469 = vadd.f32 %v216, %v468
    %v470 = vpop.f32.mrf.mxu0
    %v471 = vadd.f32 %v218, %v470
    %v472 = vpop.f32.mrf.mxu0
    %v473 = vpop.f32.mrf.mxu0
    %474 = vdwg.mxu0
    %475 = vmatprep.subr.bf16.mxu0 0
    %476 = vmatpush1.bf16.msra.mxu0 0
    %477 = vmatprep.subr.bf16.mxu0 0
    %478 = vmatpush1.bf16.msra.mxu0 0
    %479 = vmatprep.subr.bf16.mxu0 0
    %480 = vmatpush1.bf16.msra.mxu0 0
    %481 = vmatprep.subr.bf16.mxu0 0
    %482 = vmatpush1.bf16.msra.mxu0 0
    %483 = vmatprep.subr.bf16.mxu0 0
    %484 = vmatpush1.bf16.msra.mxu0 0
    %485 = vmatprep.subr.bf16.mxu0 0
    %486 = vmatpush1.bf16.msra.mxu0 0
    %487 = vmatprep.subr.bf16.mxu0 %v385
    %488 = vmatpush1.bf16.msra.mxu0 %v382
    %489 = vmatprep.subr.bf16.mxu0 %v345
    %490 = vmatpush1.bf16.msra.mxu0 %v344
    %491 = vmatprep.subr.bf16.mxu0 0
    %492 = vmatpush2.bf16.msra.mxu0 0
    %493 = vmatprep.subr.bf16.mxu0 0
    %494 = vmatpush2.bf16.msra.mxu0 0
    %495 = vmatprep.subr.bf16.mxu0 0
    %496 = vmatpush2.bf16.msra.mxu0 0
    %497 = vmatprep.subr.bf16.mxu0 0
    %498 = vmatpush2.bf16.msra.mxu0 0
    %499 = vmatprep.subr.bf16.mxu0 0
    %500 = vmatpush2.bf16.msra.mxu0 0
    %501 = vmatprep.subr.bf16.mxu0 0
    %502 = vmatpush2.bf16.msra.mxu0 0
    %503 = vmatprep.subr.bf16.mxu0 0
    %504 = vmatpush2.bf16.msra.mxu0 0
    %505 = vmatprep.subr.bf16.mxu0 0
    %506 = vmatpush2.bf16.msra.mxu0 0
    %507 = vmatprep.mubr.bf16.mxu0 0
    %508 = vmatmul.mubr.bf16.gmra.mxu0 %v366
    %v509 = vpop.f32.mrf.mxu0
    %v510 = vadd.f32 %v257, %v509
    %v511 = vpop.f32.mrf.mxu0
    %v512 = vadd.f32 %v259, %v511
    %v513 = vpop.f32.mrf.mxu0
    %v514 = vpop.f32.mrf.mxu0
    %515 = vdwg.mxu0
    %516 = vmatprep.subr.bf16.mxu0 0
    %517 = vmatpush1.bf16.msra.mxu0 0
    %518 = vmatprep.subr.bf16.mxu0 0
    %519 = vmatpush1.bf16.msra.mxu0 0
    %520 = vmatprep.subr.bf16.mxu0 0
    %521 = vmatpush1.bf16.msra.mxu0 0
    %522 = vmatprep.subr.bf16.mxu0 0
    %523 = vmatpush1.bf16.msra.mxu0 0
    %524 = vmatprep.subr.bf16.mxu0 0
    %525 = vmatpush1.bf16.msra.mxu0 0
    %526 = vmatprep.subr.bf16.mxu0 0
    %527 = vmatpush1.bf16.msra.mxu0 0
    %528 = vmatprep.subr.bf16.mxu0 %v391
    %529 = vmatpush1.bf16.msra.mxu0 %v388
    %530 = vmatprep.subr.bf16.mxu0 %v347
    %531 = vmatpush1.bf16.msra.mxu0 %v346
    %532 = vmatprep.subr.bf16.mxu0 0
    %533 = vmatpush2.bf16.msra.mxu0 0
    %534 = vmatprep.subr.bf16.mxu0 0
    %535 = vmatpush2.bf16.msra.mxu0 0
    %536 = vmatprep.subr.bf16.mxu0 0
    %537 = vmatpush2.bf16.msra.mxu0 0
    %538 = vmatprep.subr.bf16.mxu0 0
    %539 = vmatpush2.bf16.msra.mxu0 0
    %540 = vmatprep.subr.bf16.mxu0 0
    %541 = vmatpush2.bf16.msra.mxu0 0
    %542 = vmatprep.subr.bf16.mxu0 0
    %543 = vmatpush2.bf16.msra.mxu0 0
    %544 = vmatprep.subr.bf16.mxu0 0
    %545 = vmatpush2.bf16.msra.mxu0 0
    %546 = vmatprep.subr.bf16.mxu0 0
    %547 = vmatpush2.bf16.msra.mxu0 0
    %548 = vmatprep.mubr.bf16.mxu0 0
    %549 = vmatmul.mubr.bf16.gmra.mxu0 %v366
    %v550 = vpop.f32.mrf.mxu0
    %v551 = vadd.f32 %v298, %v550
    %v552 = vpop.f32.mrf.mxu0
    %v553 = vadd.f32 %v300, %v552
    %v554 = vpop.f32.mrf.mxu0
    %v555 = vpop.f32.mrf.mxu0
    %556 = vdwg.mxu0
    %v557 = vld [vmem:[%s6] ss:$2 sm:$0xff]
    %v559 = vlaneseq
    %v560 = vshrl.u32 %v559, 7
    %v561 = vsub.s32 0, %v560
    %v562 = vrot.slane %v557, %v561
    %v563 = vlaneseq
    %v564 = vshrl.u32 %v563, 7
    %v565 = vsub.s32 1, %v564
    %v566 = vrot.slane %v557, %v565
    %v567 = vlaneseq
    %v568 = vshrl.u32 %v567, 7
    %v569 = vsub.s32 2, %v568
    %v570 = vrot.slane %v557, %v569
    %v571 = vlaneseq
    %v572 = vshrl.u32 %v571, 7
    %v573 = vsub.s32 3, %v572
    %v574 = vrot.slane %v557, %v573
    %v575 = vlaneseq
    %v576 = vshrl.u32 %v575, 7
    %v577 = vsub.s32 4, %v576
    %v578 = vrot.slane %v557, %v577
    %v579 = vlaneseq
    %v580 = vshrl.u32 %v579, 7
    %v581 = vsub.s32 5, %v580
    %v582 = vrot.slane %v557, %v581
    %v583 = vlaneseq
    %v584 = vshrl.u32 %v583, 7
    %v585 = vsub.s32 6, %v584
    %v586 = vrot.slane %v557, %v585
    %v587 = vlaneseq
    %v588 = vshrl.u32 %v587, 7
    %v589 = vsub.s32 7, %v588
    %v590 = vrot.slane %v557, %v589
    %v599 = vadd.f32 %v428, %v562
    %v600 = vadd.f32 %v430, %v566
    %v601 = vadd.f32 %v469, %v570
    %v602 = vadd.f32 %v471, %v574
    %v603 = vadd.f32 %v510, %v578
    %v604 = vadd.f32 %v512, %v582
    %v605 = vadd.f32 %v551, %v586
    %v606 = vadd.f32 %v553, %v590
    %v607 = vmax.f32 %v599, 0.0
    %v608 = vmax.f32 %v600, 0.0
    %v609 = vmax.f32 %v601, 0.0
    %v610 = vmax.f32 %v602, 0.0
    %v611 = vmax.f32 %v603, 0.0
    %v612 = vmax.f32 %v604, 0.0
    %v613 = vmax.f32 %v605, 0.0
    %v614 = vmax.f32 %v606, 0.0
    %v615 = vpack.c.bf16 %v607, %v607
    %v616 = vpack.c.bf16 %v608, %v608
    %v617 = vpack.c.bf16 %v609, %v609
    %v618 = vpack.c.bf16 %v610, %v610
    %v619 = vld [vmem:[#allocation2] sm:$0xff]
    %v620 = vld [vmem:[#allocation2 + $0x8] sm:$0xff]
    %v621 = vld [vmem:[#allocation2 + $0x10] sm:$0xff]
    %v622 = vld [vmem:[#allocation2 + $0x18] sm:$0xff]
    %v623 = vld [vmem:[#allocation2 + $0x20] sm:$0xff]
    %v624 = vld [vmem:[#allocation2 + $0x28] sm:$0xff]
    %v625 = vld [vmem:[#allocation2 + $0x30] sm:$0xff]
    %v626 = vld [vmem:[#allocation2 + $0x38] sm:$0xff]
    %v627 = vld [vmem:[#allocation2 + $0x40] sm:$0xff]
    %v628 = vld [vmem:[#allocation2 + $0x48] sm:$0xff]
    %v629 = vld [vmem:[#allocation2 + $0x50] sm:$0xff]
    %v630 = vld [vmem:[#allocation2 + $0x58] sm:$0xff]
    %v631 = vld [vmem:[#allocation2 + $0x60] sm:$0xff]
    %v632 = vld [vmem:[#allocation2 + $0x68] sm:$0xff]
    %v633 = vld [vmem:[#allocation2 + $0x70] sm:$0xff]
    %v634 = vld [vmem:[#allocation2 + $0x78] sm:$0xff]
    %v635 = vld [vmem:[#allocation2 + $0x80] sm:$0xff]
    %v636 = vld [vmem:[#allocation2 + $0x88] sm:$0xff]
    %v637 = vld [vmem:[#allocation2 + $0x90] sm:$0xff]
    %v638 = vld [vmem:[#allocation2 + $0x98] sm:$0xff]
    %v639 = vld [vmem:[#allocation2 + $0xa0] sm:$0xff]
    %v640 = vld [vmem:[#allocation2 + $0xa8] sm:$0xff]
    %v641 = vld [vmem:[#allocation2 + $0xb0] sm:$0xff]
    %v642 = vld [vmem:[#allocation2 + $0xb8] sm:$0xff]
    %v643 = vld [vmem:[#allocation2 + $0xc0] sm:$0xff]
    %v644 = vld [vmem:[#allocation2 + $0xc8] sm:$0xff]
    %v645 = vld [vmem:[#allocation2 + $0xd0] sm:$0xff]
    %v646 = vld [vmem:[#allocation2 + $0xd8] sm:$0xff]
    %v647 = vld [vmem:[#allocation2 + $0xe0] sm:$0xff]
    %v648 = vld [vmem:[#allocation2 + $0xe8] sm:$0xff]
    %v649 = vld [vmem:[#allocation2 + $0xf0] sm:$0xff]
    %v650 = vld [vmem:[#allocation2 + $0xf8] sm:$0xff]
    %v651 = vld [vmem:[#allocation2 + $0x100] sm:$0xff]
    %v652 = vld [vmem:[#allocation2 + $0x108] sm:$0xff]
    %v653 = vld [vmem:[#allocation2 + $0x110] sm:$0xff]
    %v654 = vld [vmem:[#allocation2 + $0x118] sm:$0xff]
    %v655 = vld [vmem:[#allocation2 + $0x120] sm:$0xff]
    %v656 = vld [vmem:[#allocation2 + $0x128] sm:$0xff]
    %v657 = vld [vmem:[#allocation2 + $0x130] sm:$0xff]
    %v658 = vld [vmem:[#allocation2 + $0x138] sm:$0xff]
    %v659 = vld [vmem:[#allocation2 + $0x140] sm:$0xff]
    %v660 = vld [vmem:[#allocation2 + $0x148] sm:$0xff]
    %v661 = vld [vmem:[#allocation2 + $0x150] sm:$0xff]
    %v662 = vld [vmem:[#allocation2 + $0x158] sm:$0xff]
    %v663 = vld [vmem:[#allocation2 + $0x160] sm:$0xff]
    %v664 = vld [vmem:[#allocation2 + $0x168] sm:$0xff]
    %v665 = vld [vmem:[#allocation2 + $0x170] sm:$0xff]
    %v666 = vld [vmem:[#allocation2 + $0x178] sm:$0xff]
    %v667 = vld [vmem:[#allocation2 + $0x180] sm:$0xff]
    %v668 = vld [vmem:[#allocation2 + $0x188] sm:$0xff]
    %v669 = vld [vmem:[#allocation2 + $0x190] sm:$0xff]
    %v670 = vld [vmem:[#allocation2 + $0x198] sm:$0xff]
    %v671 = vld [vmem:[#allocation2 + $0x1a0] sm:$0xff]
    %v672 = vld [vmem:[#allocation2 + $0x1a8] sm:$0xff]
    %v673 = vld [vmem:[#allocation2 + $0x1b0] sm:$0xff]
    %v674 = vld [vmem:[#allocation2 + $0x1b8] sm:$0xff]
    %v675 = vld [vmem:[#allocation2 + $0x1c0] sm:$0xff]
    %v676 = vld [vmem:[#allocation2 + $0x1c8] sm:$0xff]
    %v677 = vld [vmem:[#allocation2 + $0x1d0] sm:$0xff]
    %v678 = vld [vmem:[#allocation2 + $0x1d8] sm:$0xff]
    %v679 = vld [vmem:[#allocation2 + $0x1e0] sm:$0xff]
    %v680 = vld [vmem:[#allocation2 + $0x1e8] sm:$0xff]
    %v681 = vld [vmem:[#allocation2 + $0x1f0] sm:$0xff]
    %v682 = vld [vmem:[#allocation2 + $0x1f8] sm:$0xff]
    %v683 = vld [vmem:[#allocation2 + $0x200] sm:$0xff]
    %v684 = vld [vmem:[#allocation2 + $0x208] sm:$0xff]
    %v685 = vld [vmem:[#allocation2 + $0x210] sm:$0xff]
    %v686 = vld [vmem:[#allocation2 + $0x218] sm:$0xff]
    %v687 = vld [vmem:[#allocation2 + $0x220] sm:$0xff]
    %v688 = vld [vmem:[#allocation2 + $0x228] sm:$0xff]
    %v689 = vld [vmem:[#allocation2 + $0x230] sm:$0xff]
    %v690 = vld [vmem:[#allocation2 + $0x238] sm:$0xff]
    %v691 = vld [vmem:[#allocation2 + $0x240] sm:$0xff]
    %v692 = vld [vmem:[#allocation2 + $0x248] sm:$0xff]
    %v693 = vld [vmem:[#allocation2 + $0x250] sm:$0xff]
    %v694 = vld [vmem:[#allocation2 + $0x258] sm:$0xff]
    %v695 = vld [vmem:[#allocation2 + $0x260] sm:$0xff]
    %v696 = vld [vmem:[#allocation2 + $0x268] sm:$0xff]
    %v697 = vld [vmem:[#allocation2 + $0x270] sm:$0xff]
    %v698 = vld [vmem:[#allocation2 + $0x278] sm:$0xff]
    %v699 = vld [vmem:[#allocation2 + $0x280] sm:$0xff]
    %v700 = vld [vmem:[#allocation2 + $0x288] sm:$0xff]
    %v701 = vld [vmem:[#allocation2 + $0x290] sm:$0xff]
    %v702 = vld [vmem:[#allocation2 + $0x298] sm:$0xff]
    %v703 = vld [vmem:[#allocation2 + $0x2a0] sm:$0xff]
    %v704 = vld [vmem:[#allocation2 + $0x2a8] sm:$0xff]
    %v705 = vld [vmem:[#allocation2 + $0x2b0] sm:$0xff]
    %v706 = vld [vmem:[#allocation2 + $0x2b8] sm:$0xff]
    %v707 = vld [vmem:[#allocation2 + $0x2c0] sm:$0xff]
    %v708 = vld [vmem:[#allocation2 + $0x2c8] sm:$0xff]
    %v709 = vld [vmem:[#allocation2 + $0x2d0] sm:$0xff]
    %v710 = vld [vmem:[#allocation2 + $0x2d8] sm:$0xff]
    %v711 = vld [vmem:[#allocation2 + $0x2e0] sm:$0xff]
    %v712 = vld [vmem:[#allocation2 + $0x2e8] sm:$0xff]
    %v713 = vld [vmem:[#allocation2 + $0x2f0] sm:$0xff]
    %v714 = vld [vmem:[#allocation2 + $0x2f8] sm:$0xff]
    %v715 = vld [vmem:[#allocation2 + $0x300] sm:$0xff]
    %v716 = vld [vmem:[#allocation2 + $0x308] sm:$0xff]
    %v717 = vld [vmem:[#allocation2 + $0x310] sm:$0xff]
    %v718 = vld [vmem:[#allocation2 + $0x318] sm:$0xff]
    %v719 = vld [vmem:[#allocation2 + $0x320] sm:$0xff]
    %v720 = vld [vmem:[#allocation2 + $0x328] sm:$0xff]
    %v721 = vld [vmem:[#allocation2 + $0x330] sm:$0xff]
    %v722 = vld [vmem:[#allocation2 + $0x338] sm:$0xff]
    %v723 = vld [vmem:[#allocation2 + $0x340] sm:$0xff]
    %v724 = vld [vmem:[#allocation2 + $0x348] sm:$0xff]
    %v725 = vld [vmem:[#allocation2 + $0x350] sm:$0xff]
    %v726 = vld [vmem:[#allocation2 + $0x358] sm:$0xff]
    %v727 = vld [vmem:[#allocation2 + $0x360] sm:$0xff]
    %v728 = vld [vmem:[#allocation2 + $0x368] sm:$0xff]
    %v729 = vld [vmem:[#allocation2 + $0x370] sm:$0xff]
    %v730 = vld [vmem:[#allocation2 + $0x378] sm:$0xff]
    %v731 = vld [vmem:[#allocation2 + $0x380] sm:$0xff]
    %v732 = vld [vmem:[#allocation2 + $0x388] sm:$0xff]
    %v733 = vld [vmem:[#allocation2 + $0x390] sm:$0xff]
    %v734 = vld [vmem:[#allocation2 + $0x398] sm:$0xff]
    %v735 = vld [vmem:[#allocation2 + $0x3a0] sm:$0xff]
    %v736 = vld [vmem:[#allocation2 + $0x3a8] sm:$0xff]
    %v737 = vld [vmem:[#allocation2 + $0x3b0] sm:$0xff]
    %v738 = vld [vmem:[#allocation2 + $0x3b8] sm:$0xff]
    %v739 = vld [vmem:[#allocation2 + $0x3c0] sm:$0xff]
    %v740 = vld [vmem:[#allocation2 + $0x3c8] sm:$0xff]
    %v741 = vld [vmem:[#allocation2 + $0x3d0] sm:$0xff]
    %v742 = vld [vmem:[#allocation2 + $0x3d8] sm:$0xff]
    %v743 = vld [vmem:[#allocation2 + $0x3e0] sm:$0xff]
    %v744 = vld [vmem:[#allocation2 + $0x3e8] sm:$0xff]
    %v745 = vld [vmem:[#allocation2 + $0x3f0] sm:$0xff]
    %v746 = vld [vmem:[#allocation2 + $0x3f8] sm:$0xff]
    %s747 = scalar_lea.vmem %s6, 1
    %v748 = vld [vmem:[%s747] ss:$2 sm:$0xf]
    %v750 = vlaneseq
    %v751 = vshrl.u32 %v750, 7
    %v752 = vsub.s32 0, %v751
    %v753 = vrot.slane %v748, %v752
    %v754 = vlaneseq
    %v755 = vshrl.u32 %v754, 7
    %v756 = vsub.s32 1, %v755
    %v757 = vrot.slane %v748, %v756
    %v758 = vlaneseq
    %v759 = vshrl.u32 %v758, 7
    %v760 = vsub.s32 2, %v759
    %v761 = vrot.slane %v748, %v760
    %v762 = vlaneseq
    %v763 = vshrl.u32 %v762, 7
    %v764 = vsub.s32 3, %v763
    %v765 = vrot.slane %v748, %v764
    %v898 = vunpack.c.l.b16 %v619
    %v899 = vunpack.c.h.b16 %v619
    %v900 = vunpack.c.l.b16 %v620
    %v901 = vunpack.c.h.b16 %v620
    %v902 = vunpack.c.l.b16 %v621
    %v903 = vunpack.c.h.b16 %v621
    %v904 = vunpack.c.l.b16 %v622
    %v905 = vunpack.c.h.b16 %v622
    %v906 = vunpack.c.l.b16 %v623
    %v907 = vunpack.c.h.b16 %v623
    %v908 = vunpack.c.l.b16 %v624
    %v909 = vunpack.c.h.b16 %v624
    %v910 = vunpack.c.l.b16 %v625
    %v911 = vunpack.c.h.b16 %v625
    %v912 = vunpack.c.l.b16 %v626
    %v913 = vunpack.c.h.b16 %v626
    %v914 = vunpack.c.l.b16 %v627
    %v915 = vunpack.c.h.b16 %v627
    %v916 = vunpack.c.l.b16 %v628
    %v917 = vunpack.c.h.b16 %v628
    %v918 = vunpack.c.l.b16 %v629
    %v919 = vunpack.c.h.b16 %v629
    %v920 = vunpack.c.l.b16 %v630
    %v921 = vunpack.c.h.b16 %v630
    %v922 = vunpack.c.l.b16 %v631
    %v923 = vunpack.c.h.b16 %v631
    %v924 = vunpack.c.l.b16 %v632
    %v925 = vunpack.c.h.b16 %v632
    %v926 = vunpack.c.l.b16 %v633
    %v927 = vunpack.c.h.b16 %v633
    %v928 = vunpack.c.l.b16 %v634
    %v929 = vunpack.c.h.b16 %v634
    %v930 = vunpack.c.l.b16 %v635
    %v931 = vunpack.c.h.b16 %v635
    %v932 = vunpack.c.l.b16 %v636
    %v933 = vunpack.c.h.b16 %v636
    %v934 = vunpack.c.l.b16 %v637
    %v935 = vunpack.c.h.b16 %v637
    %v936 = vunpack.c.l.b16 %v638
    %v937 = vunpack.c.h.b16 %v638
    %v938 = vunpack.c.l.b16 %v639
    %v939 = vunpack.c.h.b16 %v639
    %v940 = vunpack.c.l.b16 %v640
    %v941 = vunpack.c.h.b16 %v640
    %v942 = vunpack.c.l.b16 %v641
    %v943 = vunpack.c.h.b16 %v641
    %v944 = vunpack.c.l.b16 %v642
    %v945 = vunpack.c.h.b16 %v642
    %v946 = vunpack.c.l.b16 %v643
    %v947 = vunpack.c.h.b16 %v643
    %v948 = vunpack.c.l.b16 %v644
    %v949 = vunpack.c.h.b16 %v644
    %v950 = vunpack.c.l.b16 %v645
    %v951 = vunpack.c.h.b16 %v645
    %v952 = vunpack.c.l.b16 %v646
    %v953 = vunpack.c.h.b16 %v646
    %v954 = vunpack.c.l.b16 %v647
    %v955 = vunpack.c.h.b16 %v647
    %v956 = vunpack.c.l.b16 %v648
    %v957 = vunpack.c.h.b16 %v648
    %v958 = vunpack.c.l.b16 %v649
    %v959 = vunpack.c.h.b16 %v649
    %v960 = vunpack.c.l.b16 %v650
    %v961 = vunpack.c.h.b16 %v650
    %v962 = vunpack.c.l.b16 %v651
    %v963 = vunpack.c.h.b16 %v651
    %v964 = vunpack.c.l.b16 %v652
    %v965 = vunpack.c.h.b16 %v652
    %v966 = vunpack.c.l.b16 %v653
    %v967 = vunpack.c.h.b16 %v653
    %v968 = vunpack.c.l.b16 %v654
    %v969 = vunpack.c.h.b16 %v654
    %v970 = vunpack.c.l.b16 %v655
    %v971 = vunpack.c.h.b16 %v655
    %v972 = vunpack.c.l.b16 %v656
    %v973 = vunpack.c.h.b16 %v656
    %v974 = vunpack.c.l.b16 %v657
    %v975 = vunpack.c.h.b16 %v657
    %v976 = vunpack.c.l.b16 %v658
    %v977 = vunpack.c.h.b16 %v658
    %v978 = vunpack.c.l.b16 %v659
    %v979 = vunpack.c.h.b16 %v659
    %v980 = vunpack.c.l.b16 %v660
    %v981 = vunpack.c.h.b16 %v660
    %v982 = vunpack.c.l.b16 %v661
    %v983 = vunpack.c.h.b16 %v661
    %v984 = vunpack.c.l.b16 %v662
    %v985 = vunpack.c.h.b16 %v662
    %v986 = vunpack.c.l.b16 %v663
    %v987 = vunpack.c.h.b16 %v663
    %v988 = vunpack.c.l.b16 %v664
    %v989 = vunpack.c.h.b16 %v664
    %v990 = vunpack.c.l.b16 %v665
    %v991 = vunpack.c.h.b16 %v665
    %v992 = vunpack.c.l.b16 %v666
    %v993 = vunpack.c.h.b16 %v666
    %v994 = vunpack.c.l.b16 %v667
    %v995 = vunpack.c.h.b16 %v667
    %v996 = vunpack.c.l.b16 %v668
    %v997 = vunpack.c.h.b16 %v668
    %v998 = vunpack.c.l.b16 %v669
    %v999 = vunpack.c.h.b16 %v669
    %v1000 = vunpack.c.l.b16 %v670
    %v1001 = vunpack.c.h.b16 %v670
    %v1002 = vunpack.c.l.b16 %v671
    %v1003 = vunpack.c.h.b16 %v671
    %v1004 = vunpack.c.l.b16 %v672
    %v1005 = vunpack.c.h.b16 %v672
    %v1006 = vunpack.c.l.b16 %v673
    %v1007 = vunpack.c.h.b16 %v673
    %v1008 = vunpack.c.l.b16 %v674
    %v1009 = vunpack.c.h.b16 %v674
    %v1010 = vunpack.c.l.b16 %v675
    %v1011 = vunpack.c.h.b16 %v675
    %v1012 = vunpack.c.l.b16 %v676
    %v1013 = vunpack.c.h.b16 %v676
    %v1014 = vunpack.c.l.b16 %v677
    %v1015 = vunpack.c.h.b16 %v677
    %v1016 = vunpack.c.l.b16 %v678
    %v1017 = vunpack.c.h.b16 %v678
    %v1018 = vunpack.c.l.b16 %v679
    %v1019 = vunpack.c.h.b16 %v679
    %v1020 = vunpack.c.l.b16 %v680
    %v1021 = vunpack.c.h.b16 %v680
    %v1022 = vunpack.c.l.b16 %v681
    %v1023 = vunpack.c.h.b16 %v681
    %v1024 = vunpack.c.l.b16 %v682
    %v1025 = vunpack.c.h.b16 %v682
    %v1026 = vunpack.c.l.b16 %v683
    %v1027 = vunpack.c.h.b16 %v683
    %v1028 = vunpack.c.l.b16 %v684
    %v1029 = vunpack.c.h.b16 %v684
    %v1030 = vunpack.c.l.b16 %v685
    %v1031 = vunpack.c.h.b16 %v685
    %v1032 = vunpack.c.l.b16 %v686
    %v1033 = vunpack.c.h.b16 %v686
    %v1034 = vunpack.c.l.b16 %v687
    %v1035 = vunpack.c.h.b16 %v687
    %v1036 = vunpack.c.l.b16 %v688
    %v1037 = vunpack.c.h.b16 %v688
    %v1038 = vunpack.c.l.b16 %v689
    %v1039 = vunpack.c.h.b16 %v689
    %v1040 = vunpack.c.l.b16 %v690
    %v1041 = vunpack.c.h.b16 %v690
    %v1042 = vunpack.c.l.b16 %v691
    %v1043 = vunpack.c.h.b16 %v691
    %v1044 = vunpack.c.l.b16 %v692
    %v1045 = vunpack.c.h.b16 %v692
    %v1046 = vunpack.c.l.b16 %v693
    %v1047 = vunpack.c.h.b16 %v693
    %v1048 = vunpack.c.l.b16 %v694
    %v1049 = vunpack.c.h.b16 %v694
    %v1050 = vunpack.c.l.b16 %v695
    %v1051 = vunpack.c.h.b16 %v695
    %v1052 = vunpack.c.l.b16 %v696
    %v1053 = vunpack.c.h.b16 %v696
    %v1054 = vunpack.c.l.b16 %v697
    %v1055 = vunpack.c.h.b16 %v697
    %v1056 = vunpack.c.l.b16 %v698
    %v1057 = vunpack.c.h.b16 %v698
    %v1058 = vunpack.c.l.b16 %v699
    %v1059 = vunpack.c.h.b16 %v699
    %v1060 = vunpack.c.l.b16 %v700
    %v1061 = vunpack.c.h.b16 %v700
    %v1062 = vunpack.c.l.b16 %v701
    %v1063 = vunpack.c.h.b16 %v701
    %v1064 = vunpack.c.l.b16 %v702
    %v1065 = vunpack.c.h.b16 %v702
    %v1066 = vunpack.c.l.b16 %v703
    %v1067 = vunpack.c.h.b16 %v703
    %v1068 = vunpack.c.l.b16 %v704
    %v1069 = vunpack.c.h.b16 %v704
    %v1070 = vunpack.c.l.b16 %v705
    %v1071 = vunpack.c.h.b16 %v705
    %v1072 = vunpack.c.l.b16 %v706
    %v1073 = vunpack.c.h.b16 %v706
    %v1074 = vunpack.c.l.b16 %v707
    %v1075 = vunpack.c.h.b16 %v707
    %v1076 = vunpack.c.l.b16 %v708
    %v1077 = vunpack.c.h.b16 %v708
    %v1078 = vunpack.c.l.b16 %v709
    %v1079 = vunpack.c.h.b16 %v709
    %v1080 = vunpack.c.l.b16 %v710
    %v1081 = vunpack.c.h.b16 %v710
    %v1082 = vunpack.c.l.b16 %v711
    %v1083 = vunpack.c.h.b16 %v711
    %v1084 = vunpack.c.l.b16 %v712
    %v1085 = vunpack.c.h.b16 %v712
    %v1086 = vunpack.c.l.b16 %v713
    %v1087 = vunpack.c.h.b16 %v713
    %v1088 = vunpack.c.l.b16 %v714
    %v1089 = vunpack.c.h.b16 %v714
    %v1090 = vunpack.c.l.b16 %v715
    %v1091 = vunpack.c.h.b16 %v715
    %v1092 = vunpack.c.l.b16 %v716
    %v1093 = vunpack.c.h.b16 %v716
    %v1094 = vunpack.c.l.b16 %v717
    %v1095 = vunpack.c.h.b16 %v717
    %v1096 = vunpack.c.l.b16 %v718
    %v1097 = vunpack.c.h.b16 %v718
    %v1098 = vunpack.c.l.b16 %v719
    %v1099 = vunpack.c.h.b16 %v719
    %v1100 = vunpack.c.l.b16 %v720
    %v1101 = vunpack.c.h.b16 %v720
    %v1102 = vunpack.c.l.b16 %v721
    %v1103 = vunpack.c.h.b16 %v721
    %v1104 = vunpack.c.l.b16 %v722
    %v1105 = vunpack.c.h.b16 %v722
    %v1106 = vunpack.c.l.b16 %v723
    %v1107 = vunpack.c.h.b16 %v723
    %v1108 = vunpack.c.l.b16 %v724
    %v1109 = vunpack.c.h.b16 %v724
    %v1110 = vunpack.c.l.b16 %v725
    %v1111 = vunpack.c.h.b16 %v725
    %v1112 = vunpack.c.l.b16 %v726
    %v1113 = vunpack.c.h.b16 %v726
    %v1114 = vunpack.c.l.b16 %v727
    %v1115 = vunpack.c.h.b16 %v727
    %v1116 = vunpack.c.l.b16 %v728
    %v1117 = vunpack.c.h.b16 %v728
    %v1118 = vunpack.c.l.b16 %v729
    %v1119 = vunpack.c.h.b16 %v729
    %v1120 = vunpack.c.l.b16 %v730
    %v1121 = vunpack.c.h.b16 %v730
    %v1122 = vunpack.c.l.b16 %v731
    %v1123 = vunpack.c.h.b16 %v731
    %v1124 = vunpack.c.l.b16 %v732
    %v1125 = vunpack.c.h.b16 %v732
    %v1126 = vunpack.c.l.b16 %v733
    %v1127 = vunpack.c.h.b16 %v733
    %v1128 = vunpack.c.l.b16 %v734
    %v1129 = vunpack.c.h.b16 %v734
    %v1130 = vunpack.c.l.b16 %v735
    %v1131 = vunpack.c.h.b16 %v735
    %v1132 = vunpack.c.l.b16 %v736
    %v1133 = vunpack.c.h.b16 %v736
    %v1134 = vunpack.c.l.b16 %v737
    %v1135 = vunpack.c.h.b16 %v737
    %v1136 = vunpack.c.l.b16 %v738
    %v1137 = vunpack.c.h.b16 %v738
    %v1138 = vunpack.c.l.b16 %v739
    %v1139 = vunpack.c.h.b16 %v739
    %v1140 = vunpack.c.l.b16 %v740
    %v1141 = vunpack.c.h.b16 %v740
    %v1142 = vunpack.c.l.b16 %v741
    %v1143 = vunpack.c.h.b16 %v741
    %v1144 = vunpack.c.l.b16 %v742
    %v1145 = vunpack.c.h.b16 %v742
    %v1146 = vunpack.c.l.b16 %v743
    %v1147 = vunpack.c.h.b16 %v743
    %v1148 = vunpack.c.l.b16 %v744
    %v1149 = vunpack.c.h.b16 %v744
    %v1150 = vunpack.c.l.b16 %v745
    %v1151 = vunpack.c.h.b16 %v745
    %v1152 = vunpack.c.l.b16 %v746
    %v1153 = vunpack.c.h.b16 %v746
    %v1154 = vpack.c.b16 %v902, %v898
    %v1155 = vpack.c.b16 %v903, %v899
    %v1156 = vpack.c.b16 %v904, %v900
    %v1157 = vpack.c.b16 %v905, %v901
    %v1158 = vpack.c.b16 %v910, %v906
    %v1159 = vpack.c.b16 %v911, %v907
    %v1160 = vpack.c.b16 %v912, %v908
    %v1161 = vpack.c.b16 %v913, %v909
    %v1162 = vpack.c.b16 %v918, %v914
    %v1163 = vpack.c.b16 %v919, %v915
    %v1164 = vpack.c.b16 %v920, %v916
    %v1165 = vpack.c.b16 %v921, %v917
    %v1166 = vpack.c.b16 %v926, %v922
    %v1167 = vpack.c.b16 %v927, %v923
    %v1168 = vpack.c.b16 %v928, %v924
    %v1169 = vpack.c.b16 %v929, %v925
    %v1170 = vpack.c.b16 %v934, %v930
    %v1171 = vpack.c.b16 %v935, %v931
    %v1172 = vpack.c.b16 %v936, %v932
    %v1173 = vpack.c.b16 %v937, %v933
    %v1174 = vpack.c.b16 %v942, %v938
    %v1175 = vpack.c.b16 %v943, %v939
    %v1176 = vpack.c.b16 %v944, %v940
    %v1177 = vpack.c.b16 %v945, %v941
    %v1178 = vpack.c.b16 %v950, %v946
    %v1179 = vpack.c.b16 %v951, %v947
    %v1180 = vpack.c.b16 %v952, %v948
    %v1181 = vpack.c.b16 %v953, %v949
    %v1182 = vpack.c.b16 %v958, %v954
    %v1183 = vpack.c.b16 %v959, %v955
    %v1184 = vpack.c.b16 %v960, %v956
    %v1185 = vpack.c.b16 %v961, %v957
    %v1186 = vpack.c.b16 %v966, %v962
    %v1187 = vpack.c.b16 %v967, %v963
    %v1188 = vpack.c.b16 %v968, %v964
    %v1189 = vpack.c.b16 %v969, %v965
    %v1190 = vpack.c.b16 %v974, %v970
    %v1191 = vpack.c.b16 %v975, %v971
    %v1192 = vpack.c.b16 %v976, %v972
    %v1193 = vpack.c.b16 %v977, %v973
    %v1194 = vpack.c.b16 %v982, %v978
    %v1195 = vpack.c.b16 %v983, %v979
    %v1196 = vpack.c.b16 %v984, %v980
    %v1197 = vpack.c.b16 %v985, %v981
    %v1198 = vpack.c.b16 %v990, %v986
    %v1199 = vpack.c.b16 %v991, %v987
    %v1200 = vpack.c.b16 %v992, %v988
    %v1201 = vpack.c.b16 %v993, %v989
    %v1202 = vpack.c.b16 %v998, %v994
    %v1203 = vpack.c.b16 %v999, %v995
    %v1204 = vpack.c.b16 %v1000, %v996
    %v1205 = vpack.c.b16 %v1001, %v997
    %v1206 = vpack.c.b16 %v1006, %v1002
    %v1207 = vpack.c.b16 %v1007, %v1003
    %v1208 = vpack.c.b16 %v1008, %v1004
    %v1209 = vpack.c.b16 %v1009, %v1005
    %v1210 = vpack.c.b16 %v1014, %v1010
    %v1211 = vpack.c.b16 %v1015, %v1011
    %v1212 = vpack.c.b16 %v1016, %v1012
    %v1213 = vpack.c.b16 %v1017, %v1013
    %v1214 = vpack.c.b16 %v1022, %v1018
    %v1215 = vpack.c.b16 %v1023, %v1019
    %v1216 = vpack.c.b16 %v1024, %v1020
    %v1217 = vpack.c.b16 %v1025, %v1021
    %v1218 = vpack.c.b16 %v1030, %v1026
    %v1219 = vpack.c.b16 %v1031, %v1027
    %v1220 = vpack.c.b16 %v1032, %v1028
    %v1221 = vpack.c.b16 %v1033, %v1029
    %v1222 = vpack.c.b16 %v1038, %v1034
    %v1223 = vpack.c.b16 %v1039, %v1035
    %v1224 = vpack.c.b16 %v1040, %v1036
    %v1225 = vpack.c.b16 %v1041, %v1037
    %v1226 = vpack.c.b16 %v1046, %v1042
    %v1227 = vpack.c.b16 %v1047, %v1043
    %v1228 = vpack.c.b16 %v1048, %v1044
    %v1229 = vpack.c.b16 %v1049, %v1045
    %v1230 = vpack.c.b16 %v1054, %v1050
    %v1231 = vpack.c.b16 %v1055, %v1051
    %v1232 = vpack.c.b16 %v1056, %v1052
    %v1233 = vpack.c.b16 %v1057, %v1053
    %v1234 = vpack.c.b16 %v1062, %v1058
    %v1235 = vpack.c.b16 %v1063, %v1059
    %v1236 = vpack.c.b16 %v1064, %v1060
    %v1237 = vpack.c.b16 %v1065, %v1061
    %v1238 = vpack.c.b16 %v1070, %v1066
    %v1239 = vpack.c.b16 %v1071, %v1067
    %v1240 = vpack.c.b16 %v1072, %v1068
    %v1241 = vpack.c.b16 %v1073, %v1069
    %v1242 = vpack.c.b16 %v1078, %v1074
    %v1243 = vpack.c.b16 %v1079, %v1075
    %v1244 = vpack.c.b16 %v1080, %v1076
    %v1245 = vpack.c.b16 %v1081, %v1077
    %v1246 = vpack.c.b16 %v1086, %v1082
    %v1247 = vpack.c.b16 %v1087, %v1083
    %v1248 = vpack.c.b16 %v1088, %v1084
    %v1249 = vpack.c.b16 %v1089, %v1085
    %v1250 = vpack.c.b16 %v1094, %v1090
    %v1251 = vpack.c.b16 %v1095, %v1091
    %v1252 = vpack.c.b16 %v1096, %v1092
    %v1253 = vpack.c.b16 %v1097, %v1093
    %v1254 = vpack.c.b16 %v1102, %v1098
    %v1255 = vpack.c.b16 %v1103, %v1099
    %v1256 = vpack.c.b16 %v1104, %v1100
    %v1257 = vpack.c.b16 %v1105, %v1101
    %v1258 = vpack.c.b16 %v1110, %v1106
    %v1259 = vpack.c.b16 %v1111, %v1107
    %v1260 = vpack.c.b16 %v1112, %v1108
    %v1261 = vpack.c.b16 %v1113, %v1109
    %v1262 = vpack.c.b16 %v1118, %v1114
    %v1263 = vpack.c.b16 %v1119, %v1115
    %v1264 = vpack.c.b16 %v1120, %v1116
    %v1265 = vpack.c.b16 %v1121, %v1117
    %v1266 = vpack.c.b16 %v1126, %v1122
    %v1267 = vpack.c.b16 %v1127, %v1123
    %v1268 = vpack.c.b16 %v1128, %v1124
    %v1269 = vpack.c.b16 %v1129, %v1125
    %v1270 = vpack.c.b16 %v1134, %v1130
    %v1271 = vpack.c.b16 %v1135, %v1131
    %v1272 = vpack.c.b16 %v1136, %v1132
    %v1273 = vpack.c.b16 %v1137, %v1133
    %v1274 = vpack.c.b16 %v1142, %v1138
    %v1275 = vpack.c.b16 %v1143, %v1139
    %v1276 = vpack.c.b16 %v1144, %v1140
    %v1277 = vpack.c.b16 %v1145, %v1141
    %v1278 = vpack.c.b16 %v1150, %v1146
    %v1279 = vpack.c.b16 %v1151, %v1147
    %v1280 = vpack.c.b16 %v1152, %v1148
    %v1281 = vpack.c.b16 %v1153, %v1149
    %1410 = vmatprep.subr.bf16.mxu0 %v1183
    %1411 = vmatpush1.bf16.msra.mxu0 %v1182
    %1412 = vmatprep.subr.bf16.mxu0 %v1179
    %1413 = vmatpush1.bf16.msra.mxu0 %v1178
    %1414 = vmatprep.subr.bf16.mxu0 %v1175
    %1415 = vmatpush1.bf16.msra.mxu0 %v1174
    %1416 = vmatprep.subr.bf16.mxu0 %v1171
    %1417 = vmatpush1.bf16.msra.mxu0 %v1170
    %1418 = vmatprep.subr.bf16.mxu0 %v1167
    %1419 = vmatpush1.bf16.msra.mxu0 %v1166
    %1420 = vmatprep.subr.bf16.mxu0 %v1163
    %1421 = vmatpush1.bf16.msra.mxu0 %v1162
    %1422 = vmatprep.subr.bf16.mxu0 %v1159
    %1423 = vmatpush1.bf16.msra.mxu0 %v1158
    %1424 = vmatprep.subr.bf16.mxu0 %v1155
    %1425 = vmatpush1.bf16.msra.mxu0 %v1154
    %1426 = vmatprep.subr.bf16.mxu0 %v1215
    %1427 = vmatpush2.bf16.msra.mxu0 %v1214
    %1428 = vmatprep.subr.bf16.mxu0 %v1211
    %1429 = vmatpush2.bf16.msra.mxu0 %v1210
    %1430 = vmatprep.subr.bf16.mxu0 %v1207
    %1431 = vmatpush2.bf16.msra.mxu0 %v1206
    %1432 = vmatprep.subr.bf16.mxu0 %v1203
    %1433 = vmatpush2.bf16.msra.mxu0 %v1202
    %1434 = vmatprep.subr.bf16.mxu0 %v1199
    %1435 = vmatpush2.bf16.msra.mxu0 %v1198
    %1436 = vmatprep.subr.bf16.mxu0 %v1195
    %1437 = vmatpush2.bf16.msra.mxu0 %v1194
    %1438 = vmatprep.subr.bf16.mxu0 %v1191
    %1439 = vmatpush2.bf16.msra.mxu0 %v1190
    %1440 = vmatprep.subr.bf16.mxu0 %v1187
    %1441 = vmatpush2.bf16.msra.mxu0 %v1186
    %1442 = vmatprep.mubr.bf16.mxu0 %v616
    %1443 = vmatmul.mubr.bf16.gmra.mxu0 %v615
    %v1444 = vpop.f32.mrf.mxu0
    %v1445 = vadd.f32 %v753, %v1444
    %v1446 = vpop.f32.mrf.mxu0
    %v1447 = vadd.f32 %v757, %v1446
    %v1448 = vpop.f32.mrf.mxu0
    %v1449 = vpop.f32.mrf.mxu0
    %1450 = vdwg.mxu0
    %1451 = vmatprep.subr.bf16.mxu0 %v1247
    %1452 = vmatpush1.bf16.msra.mxu0 %v1246
    %1453 = vmatprep.subr.bf16.mxu0 %v1243
    %1454 = vmatpush1.bf16.msra.mxu0 %v1242
    %1455 = vmatprep.subr.bf16.mxu0 %v1239
    %1456 = vmatpush1.bf16.msra.mxu0 %v1238
    %1457 = vmatprep.subr.bf16.mxu0 %v1235
    %1458 = vmatpush1.bf16.msra.mxu0 %v1234
    %1459 = vmatprep.subr.bf16.mxu0 %v1231
    %1460 = vmatpush1.bf16.msra.mxu0 %v1230
    %1461 = vmatprep.subr.bf16.mxu0 %v1227
    %1462 = vmatpush1.bf16.msra.mxu0 %v1226
    %1463 = vmatprep.subr.bf16.mxu0 %v1223
    %1464 = vmatpush1.bf16.msra.mxu0 %v1222
    %1465 = vmatprep.subr.bf16.mxu0 %v1219
    %1466 = vmatpush1.bf16.msra.mxu0 %v1218
    %1467 = vmatprep.subr.bf16.mxu0 %v1279
    %1468 = vmatpush2.bf16.msra.mxu0 %v1278
    %1469 = vmatprep.subr.bf16.mxu0 %v1275
    %1470 = vmatpush2.bf16.msra.mxu0 %v1274
    %1471 = vmatprep.subr.bf16.mxu0 %v1271
    %1472 = vmatpush2.bf16.msra.mxu0 %v1270
    %1473 = vmatprep.subr.bf16.mxu0 %v1267
    %1474 = vmatpush2.bf16.msra.mxu0 %v1266
    %1475 = vmatprep.subr.bf16.mxu0 %v1263
    %1476 = vmatpush2.bf16.msra.mxu0 %v1262
    %1477 = vmatprep.subr.bf16.mxu0 %v1259
    %1478 = vmatpush2.bf16.msra.mxu0 %v1258
    %1479 = vmatprep.subr.bf16.mxu0 %v1255
    %1480 = vmatpush2.bf16.msra.mxu0 %v1254
    %1481 = vmatprep.subr.bf16.mxu0 %v1251
    %1482 = vmatpush2.bf16.msra.mxu0 %v1250
    %1483 = vmatprep.mubr.bf16.mxu0 %v618
    %1484 = vmatmul.mubr.bf16.gmra.mxu0 %v617
    %v1485 = vpop.f32.mrf.mxu0
    %v1486 = vadd.f32 %v1445, %v1485
    %v1487 = vpop.f32.mrf.mxu0
    %v1488 = vadd.f32 %v1447, %v1487
    %v1489 = vpop.f32.mrf.mxu0
    %v1490 = vpop.f32.mrf.mxu0
    %1491 = vdwg.mxu0
    %1492 = vmatprep.subr.bf16.mxu0 %v1185
    %1493 = vmatpush1.bf16.msra.mxu0 %v1184
    %1494 = vmatprep.subr.bf16.mxu0 %v1181
    %1495 = vmatpush1.bf16.msra.mxu0 %v1180
    %1496 = vmatprep.subr.bf16.mxu0 %v1177
    %1497 = vmatpush1.bf16.msra.mxu0 %v1176
    %1498 = vmatprep.subr.bf16.mxu0 %v1173
    %1499 = vmatpush1.bf16.msra.mxu0 %v1172
    %1500 = vmatprep.subr.bf16.mxu0 %v1169
    %1501 = vmatpush1.bf16.msra.mxu0 %v1168
    %1502 = vmatprep.subr.bf16.mxu0 %v1165
    %1503 = vmatpush1.bf16.msra.mxu0 %v1164
    %1504 = vmatprep.subr.bf16.mxu0 %v1161
    %1505 = vmatpush1.bf16.msra.mxu0 %v1160
    %1506 = vmatprep.subr.bf16.mxu0 %v1157
    %1507 = vmatpush1.bf16.msra.mxu0 %v1156
    %1508 = vmatprep.subr.bf16.mxu0 %v1217
    %1509 = vmatpush2.bf16.msra.mxu0 %v1216
    %1510 = vmatprep.subr.bf16.mxu0 %v1213
    %1511 = vmatpush2.bf16.msra.mxu0 %v1212
    %1512 = vmatprep.subr.bf16.mxu0 %v1209
    %1513 = vmatpush2.bf16.msra.mxu0 %v1208
    %1514 = vmatprep.subr.bf16.mxu0 %v1205
    %1515 = vmatpush2.bf16.msra.mxu0 %v1204
    %1516 = vmatprep.subr.bf16.mxu0 %v1201
    %1517 = vmatpush2.bf16.msra.mxu0 %v1200
    %1518 = vmatprep.subr.bf16.mxu0 %v1197
    %1519 = vmatpush2.bf16.msra.mxu0 %v1196
    %1520 = vmatprep.subr.bf16.mxu0 %v1193
    %1521 = vmatpush2.bf16.msra.mxu0 %v1192
    %1522 = vmatprep.subr.bf16.mxu0 %v1189
    %1523 = vmatpush2.bf16.msra.mxu0 %v1188
    %1524 = vmatprep.mubr.bf16.mxu0 %v616
    %1525 = vmatmul.mubr.bf16.gmra.mxu0 %v615
    %v1526 = vpop.f32.mrf.mxu0
    %v1527 = vadd.f32 %v761, %v1526
    %v1528 = vpop.f32.mrf.mxu0
    %v1529 = vadd.f32 %v765, %v1528
    %v1530 = vpop.f32.mrf.mxu0
    %v1531 = vpop.f32.mrf.mxu0
    %1532 = vdwg.mxu0
    %1533 = vmatprep.subr.bf16.mxu0 %v1249
    %1534 = vmatpush1.bf16.msra.mxu0 %v1248
    %1535 = vmatprep.subr.bf16.mxu0 %v1245
    %1536 = vmatpush1.bf16.msra.mxu0 %v1244
    %1537 = vmatprep.subr.bf16.mxu0 %v1241
    %1538 = vmatpush1.bf16.msra.mxu0 %v1240
    %1539 = vmatprep.subr.bf16.mxu0 %v1237
    %1540 = vmatpush1.bf16.msra.mxu0 %v1236
    %1541 = vmatprep.subr.bf16.mxu0 %v1233
    %1542 = vmatpush1.bf16.msra.mxu0 %v1232
    %1543 = vmatprep.subr.bf16.mxu0 %v1229
    %1544 = vmatpush1.bf16.msra.mxu0 %v1228
    %1545 = vmatprep.subr.bf16.mxu0 %v1225
    %1546 = vmatpush1.bf16.msra.mxu0 %v1224
    %1547 = vmatprep.subr.bf16.mxu0 %v1221
    %1548 = vmatpush1.bf16.msra.mxu0 %v1220
    %1549 = vmatprep.subr.bf16.mxu0 %v1281
    %1550 = vmatpush2.bf16.msra.mxu0 %v1280
    %1551 = vmatprep.subr.bf16.mxu0 %v1277
    %1552 = vmatpush2.bf16.msra.mxu0 %v1276
    %1553 = vmatprep.subr.bf16.mxu0 %v1273
    %1554 = vmatpush2.bf16.msra.mxu0 %v1272
    %1555 = vmatprep.subr.bf16.mxu0 %v1269
    %1556 = vmatpush2.bf16.msra.mxu0 %v1268
    %1557 = vmatprep.subr.bf16.mxu0 %v1265
    %1558 = vmatpush2.bf16.msra.mxu0 %v1264
    %1559 = vmatprep.subr.bf16.mxu0 %v1261
    %1560 = vmatpush2.bf16.msra.mxu0 %v1260
    %1561 = vmatprep.subr.bf16.mxu0 %v1257
    %1562 = vmatpush2.bf16.msra.mxu0 %v1256
    %1563 = vmatprep.subr.bf16.mxu0 %v1253
    %1564 = vmatpush2.bf16.msra.mxu0 %v1252
    %1565 = vmatprep.mubr.bf16.mxu0 %v618
    %1566 = vmatmul.mubr.bf16.gmra.mxu0 %v617
    %v1567 = vpop.f32.mrf.mxu0
    %v1568 = vadd.f32 %v1527, %v1567
    %v1569 = vpop.f32.mrf.mxu0
    %v1570 = vadd.f32 %v1529, %v1569
    %v1571 = vpop.f32.mrf.mxu0
    %v1572 = vpop.f32.mrf.mxu0
    %1573 = vdwg.mxu0
    %v1574 = vpack.c.bf16 %v611, %v611
    %v1575 = vpack.c.bf16 %v612, %v612
    %v1576 = vpack.c.bf16 %v613, %v613
    %v1577 = vpack.c.bf16 %v614, %v614
    %s1578 = scalar_lea.vmem [#allocation2], 1024
    %v1579 = vld [vmem:[%s1578] sm:$0xff]
    %v1580 = vld [vmem:[%s1578 + $0x8] sm:$0xff]
    %v1581 = vld [vmem:[%s1578 + $0x10] sm:$0xff]
    %v1582 = vld [vmem:[%s1578 + $0x18] sm:$0xff]
    %v1583 = vld [vmem:[%s1578 + $0x20] sm:$0xff]
    %v1584 = vld [vmem:[%s1578 + $0x28] sm:$0xff]
    %v1585 = vld [vmem:[%s1578 + $0x30] sm:$0xff]
    %v1586 = vld [vmem:[%s1578 + $0x38] sm:$0xff]
    %v1587 = vld [vmem:[%s1578 + $0x40] sm:$0xff]
    %v1588 = vld [vmem:[%s1578 + $0x48] sm:$0xff]
    %v1589 = vld [vmem:[%s1578 + $0x50] sm:$0xff]
    %v1590 = vld [vmem:[%s1578 + $0x58] sm:$0xff]
    %v1591 = vld [vmem:[%s1578 + $0x60] sm:$0xff]
    %v1592 = vld [vmem:[%s1578 + $0x68] sm:$0xff]
    %v1593 = vld [vmem:[%s1578 + $0x70] sm:$0xff]
    %v1594 = vld [vmem:[%s1578 + $0x78] sm:$0xff]
    %v1595 = vld [vmem:[%s1578 + $0x80] sm:$0xff]
    %v1596 = vld [vmem:[%s1578 + $0x88] sm:$0xff]
    %v1597 = vld [vmem:[%s1578 + $0x90] sm:$0xff]
    %v1598 = vld [vmem:[%s1578 + $0x98] sm:$0xff]
    %v1599 = vld [vmem:[%s1578 + $0xa0] sm:$0xff]
    %v1600 = vld [vmem:[%s1578 + $0xa8] sm:$0xff]
    %v1601 = vld [vmem:[%s1578 + $0xb0] sm:$0xff]
    %v1602 = vld [vmem:[%s1578 + $0xb8] sm:$0xff]
    %v1603 = vld [vmem:[%s1578 + $0xc0] sm:$0xff]
    %v1604 = vld [vmem:[%s1578 + $0xc8] sm:$0xff]
    %v1605 = vld [vmem:[%s1578 + $0xd0] sm:$0xff]
    %v1606 = vld [vmem:[%s1578 + $0xd8] sm:$0xff]
    %v1607 = vld [vmem:[%s1578 + $0xe0] sm:$0xff]
    %v1608 = vld [vmem:[%s1578 + $0xe8] sm:$0xff]
    %v1609 = vld [vmem:[%s1578 + $0xf0] sm:$0xff]
    %v1610 = vld [vmem:[%s1578 + $0xf8] sm:$0xff]
    %v1611 = vld [vmem:[%s1578 + $0x100] sm:$0xff]
    %v1612 = vld [vmem:[%s1578 + $0x108] sm:$0xff]
    %v1613 = vld [vmem:[%s1578 + $0x110] sm:$0xff]
    %v1614 = vld [vmem:[%s1578 + $0x118] sm:$0xff]
    %v1615 = vld [vmem:[%s1578 + $0x120] sm:$0xff]
    %v1616 = vld [vmem:[%s1578 + $0x128] sm:$0xff]
    %v1617 = vld [vmem:[%s1578 + $0x130] sm:$0xff]
    %v1618 = vld [vmem:[%s1578 + $0x138] sm:$0xff]
    %v1619 = vld [vmem:[%s1578 + $0x140] sm:$0xff]
    %v1620 = vld [vmem:[%s1578 + $0x148] sm:$0xff]
    %v1621 = vld [vmem:[%s1578 + $0x150] sm:$0xff]
    %v1622 = vld [vmem:[%s1578 + $0x158] sm:$0xff]
    %v1623 = vld [vmem:[%s1578 + $0x160] sm:$0xff]
    %v1624 = vld [vmem:[%s1578 + $0x168] sm:$0xff]
    %v1625 = vld [vmem:[%s1578 + $0x170] sm:$0xff]
    %v1626 = vld [vmem:[%s1578 + $0x178] sm:$0xff]
    %v1627 = vld [vmem:[%s1578 + $0x180] sm:$0xff]
    %v1628 = vld [vmem:[%s1578 + $0x188] sm:$0xff]
    %v1629 = vld [vmem:[%s1578 + $0x190] sm:$0xff]
    %v1630 = vld [vmem:[%s1578 + $0x198] sm:$0xff]
    %v1631 = vld [vmem:[%s1578 + $0x1a0] sm:$0xff]
    %v1632 = vld [vmem:[%s1578 + $0x1a8] sm:$0xff]
    %v1633 = vld [vmem:[%s1578 + $0x1b0] sm:$0xff]
    %v1634 = vld [vmem:[%s1578 + $0x1b8] sm:$0xff]
    %v1635 = vld [vmem:[%s1578 + $0x1c0] sm:$0xff]
    %v1636 = vld [vmem:[%s1578 + $0x1c8] sm:$0xff]
    %v1637 = vld [vmem:[%s1578 + $0x1d0] sm:$0xff]
    %v1638 = vld [vmem:[%s1578 + $0x1d8] sm:$0xff]
    %v1639 = vld [vmem:[%s1578 + $0x1e0] sm:$0xff]
    %v1640 = vld [vmem:[%s1578 + $0x1e8] sm:$0xff]
    %v1641 = vld [vmem:[%s1578 + $0x1f0] sm:$0xff]
    %v1642 = vld [vmem:[%s1578 + $0x1f8] sm:$0xff]
    %v1643 = vld [vmem:[%s1578 + $0x200] sm:$0xff]
    %v1644 = vld [vmem:[%s1578 + $0x208] sm:$0xff]
    %v1645 = vld [vmem:[%s1578 + $0x210] sm:$0xff]
    %v1646 = vld [vmem:[%s1578 + $0x218] sm:$0xff]
    %v1647 = vld [vmem:[%s1578 + $0x220] sm:$0xff]
    %v1648 = vld [vmem:[%s1578 + $0x228] sm:$0xff]
    %v1649 = vld [vmem:[%s1578 + $0x230] sm:$0xff]
    %v1650 = vld [vmem:[%s1578 + $0x238] sm:$0xff]
    %v1651 = vld [vmem:[%s1578 + $0x240] sm:$0xff]
    %v1652 = vld [vmem:[%s1578 + $0x248] sm:$0xff]
    %v1653 = vld [vmem:[%s1578 + $0x250] sm:$0xff]
    %v1654 = vld [vmem:[%s1578 + $0x258] sm:$0xff]
    %v1655 = vld [vmem:[%s1578 + $0x260] sm:$0xff]
    %v1656 = vld [vmem:[%s1578 + $0x268] sm:$0xff]
    %v1657 = vld [vmem:[%s1578 + $0x270] sm:$0xff]
    %v1658 = vld [vmem:[%s1578 + $0x278] sm:$0xff]
    %v1659 = vld [vmem:[%s1578 + $0x280] sm:$0xff]
    %v1660 = vld [vmem:[%s1578 + $0x288] sm:$0xff]
    %v1661 = vld [vmem:[%s1578 + $0x290] sm:$0xff]
    %v1662 = vld [vmem:[%s1578 + $0x298] sm:$0xff]
    %v1663 = vld [vmem:[%s1578 + $0x2a0] sm:$0xff]
    %v1664 = vld [vmem:[%s1578 + $0x2a8] sm:$0xff]
    %v1665 = vld [vmem:[%s1578 + $0x2b0] sm:$0xff]
    %v1666 = vld [vmem:[%s1578 + $0x2b8] sm:$0xff]
    %v1667 = vld [vmem:[%s1578 + $0x2c0] sm:$0xff]
    %v1668 = vld [vmem:[%s1578 + $0x2c8] sm:$0xff]
    %v1669 = vld [vmem:[%s1578 + $0x2d0] sm:$0xff]
    %v1670 = vld [vmem:[%s1578 + $0x2d8] sm:$0xff]
    %v1671 = vld [vmem:[%s1578 + $0x2e0] sm:$0xff]
    %v1672 = vld [vmem:[%s1578 + $0x2e8] sm:$0xff]
    %v1673 = vld [vmem:[%s1578 + $0x2f0] sm:$0xff]
    %v1674 = vld [vmem:[%s1578 + $0x2f8] sm:$0xff]
    %v1675 = vld [vmem:[%s1578 + $0x300] sm:$0xff]
    %v1676 = vld [vmem:[%s1578 + $0x308] sm:$0xff]
    %v1677 = vld [vmem:[%s1578 + $0x310] sm:$0xff]
    %v1678 = vld [vmem:[%s1578 + $0x318] sm:$0xff]
    %v1679 = vld [vmem:[%s1578 + $0x320] sm:$0xff]
    %v1680 = vld [vmem:[%s1578 + $0x328] sm:$0xff]
    %v1681 = vld [vmem:[%s1578 + $0x330] sm:$0xff]
    %v1682 = vld [vmem:[%s1578 + $0x338] sm:$0xff]
    %v1683 = vld [vmem:[%s1578 + $0x340] sm:$0xff]
    %v1684 = vld [vmem:[%s1578 + $0x348] sm:$0xff]
    %v1685 = vld [vmem:[%s1578 + $0x350] sm:$0xff]
    %v1686 = vld [vmem:[%s1578 + $0x358] sm:$0xff]
    %v1687 = vld [vmem:[%s1578 + $0x360] sm:$0xff]
    %v1688 = vld [vmem:[%s1578 + $0x368] sm:$0xff]
    %v1689 = vld [vmem:[%s1578 + $0x370] sm:$0xff]
    %v1690 = vld [vmem:[%s1578 + $0x378] sm:$0xff]
    %v1691 = vld [vmem:[%s1578 + $0x380] sm:$0xff]
    %v1692 = vld [vmem:[%s1578 + $0x388] sm:$0xff]
    %v1693 = vld [vmem:[%s1578 + $0x390] sm:$0xff]
    %v1694 = vld [vmem:[%s1578 + $0x398] sm:$0xff]
    %v1695 = vld [vmem:[%s1578 + $0x3a0] sm:$0xff]
    %v1696 = vld [vmem:[%s1578 + $0x3a8] sm:$0xff]
    %v1697 = vld [vmem:[%s1578 + $0x3b0] sm:$0xff]
    %v1698 = vld [vmem:[%s1578 + $0x3b8] sm:$0xff]
    %v1699 = vld [vmem:[%s1578 + $0x3c0] sm:$0xff]
    %v1700 = vld [vmem:[%s1578 + $0x3c8] sm:$0xff]
    %v1701 = vld [vmem:[%s1578 + $0x3d0] sm:$0xff]
    %v1702 = vld [vmem:[%s1578 + $0x3d8] sm:$0xff]
    %v1703 = vld [vmem:[%s1578 + $0x3e0] sm:$0xff]
    %v1704 = vld [vmem:[%s1578 + $0x3e8] sm:$0xff]
    %v1705 = vld [vmem:[%s1578 + $0x3f0] sm:$0xff]
    %v1706 = vld [vmem:[%s1578 + $0x3f8] sm:$0xff]
    %s1707 = scalar_lea.vmem %s6, 9
    %v1708 = vld [vmem:[%s1707] ss:$2 sm:$0xf]
    %v1710 = vlaneseq
    %v1711 = vshrl.u32 %v1710, 7
    %v1712 = vsub.s32 0, %v1711
    %v1713 = vrot.slane %v1708, %v1712
    %v1714 = vlaneseq
    %v1715 = vshrl.u32 %v1714, 7
    %v1716 = vsub.s32 1, %v1715
    %v1717 = vrot.slane %v1708, %v1716
    %v1718 = vlaneseq
    %v1719 = vshrl.u32 %v1718, 7
    %v1720 = vsub.s32 2, %v1719
    %v1721 = vrot.slane %v1708, %v1720
    %v1722 = vlaneseq
    %v1723 = vshrl.u32 %v1722, 7
    %v1724 = vsub.s32 3, %v1723
    %v1725 = vrot.slane %v1708, %v1724
    %v1858 = vunpack.c.l.b16 %v1579
    %v1859 = vunpack.c.h.b16 %v1579
    %v1860 = vunpack.c.l.b16 %v1580
    %v1861 = vunpack.c.h.b16 %v1580
    %v1862 = vunpack.c.l.b16 %v1581
    %v1863 = vunpack.c.h.b16 %v1581
    %v1864 = vunpack.c.l.b16 %v1582
    %v1865 = vunpack.c.h.b16 %v1582
    %v1866 = vunpack.c.l.b16 %v1583
    %v1867 = vunpack.c.h.b16 %v1583
    %v1868 = vunpack.c.l.b16 %v1584
    %v1869 = vunpack.c.h.b16 %v1584
    %v1870 = vunpack.c.l.b16 %v1585
    %v1871 = vunpack.c.h.b16 %v1585
    %v1872 = vunpack.c.l.b16 %v1586
    %v1873 = vunpack.c.h.b16 %v1586
    %v1874 = vunpack.c.l.b16 %v1587
    %v1875 = vunpack.c.h.b16 %v1587
    %v1876 = vunpack.c.l.b16 %v1588
    %v1877 = vunpack.c.h.b16 %v1588
    %v1878 = vunpack.c.l.b16 %v1589
    %v1879 = vunpack.c.h.b16 %v1589
    %v1880 = vunpack.c.l.b16 %v1590
    %v1881 = vunpack.c.h.b16 %v1590
    %v1882 = vunpack.c.l.b16 %v1591
    %v1883 = vunpack.c.h.b16 %v1591
    %v1884 = vunpack.c.l.b16 %v1592
    %v1885 = vunpack.c.h.b16 %v1592
    %v1886 = vunpack.c.l.b16 %v1593
    %v1887 = vunpack.c.h.b16 %v1593
    %v1888 = vunpack.c.l.b16 %v1594
    %v1889 = vunpack.c.h.b16 %v1594
    %v1890 = vunpack.c.l.b16 %v1595
    %v1891 = vunpack.c.h.b16 %v1595
    %v1892 = vunpack.c.l.b16 %v1596
    %v1893 = vunpack.c.h.b16 %v1596
    %v1894 = vunpack.c.l.b16 %v1597
    %v1895 = vunpack.c.h.b16 %v1597
    %v1896 = vunpack.c.l.b16 %v1598
    %v1897 = vunpack.c.h.b16 %v1598
    %v1898 = vunpack.c.l.b16 %v1599
    %v1899 = vunpack.c.h.b16 %v1599
    %v1900 = vunpack.c.l.b16 %v1600
    %v1901 = vunpack.c.h.b16 %v1600
    %v1902 = vunpack.c.l.b16 %v1601
    %v1903 = vunpack.c.h.b16 %v1601
    %v1904 = vunpack.c.l.b16 %v1602
    %v1905 = vunpack.c.h.b16 %v1602
    %v1906 = vunpack.c.l.b16 %v1603
    %v1907 = vunpack.c.h.b16 %v1603
    %v1908 = vunpack.c.l.b16 %v1604
    %v1909 = vunpack.c.h.b16 %v1604
    %v1910 = vunpack.c.l.b16 %v1605
    %v1911 = vunpack.c.h.b16 %v1605
    %v1912 = vunpack.c.l.b16 %v1606
    %v1913 = vunpack.c.h.b16 %v1606
    %v1914 = vunpack.c.l.b16 %v1607
    %v1915 = vunpack.c.h.b16 %v1607
    %v1916 = vunpack.c.l.b16 %v1608
    %v1917 = vunpack.c.h.b16 %v1608
    %v1918 = vunpack.c.l.b16 %v1609
    %v1919 = vunpack.c.h.b16 %v1609
    %v1920 = vunpack.c.l.b16 %v1610
    %v1921 = vunpack.c.h.b16 %v1610
    %v1922 = vunpack.c.l.b16 %v1611
    %v1923 = vunpack.c.h.b16 %v1611
    %v1924 = vunpack.c.l.b16 %v1612
    %v1925 = vunpack.c.h.b16 %v1612
    %v1926 = vunpack.c.l.b16 %v1613
    %v1927 = vunpack.c.h.b16 %v1613
    %v1928 = vunpack.c.l.b16 %v1614
    %v1929 = vunpack.c.h.b16 %v1614
    %v1930 = vunpack.c.l.b16 %v1615
    %v1931 = vunpack.c.h.b16 %v1615
    %v1932 = vunpack.c.l.b16 %v1616
    %v1933 = vunpack.c.h.b16 %v1616
    %v1934 = vunpack.c.l.b16 %v1617
    %v1935 = vunpack.c.h.b16 %v1617
    %v1936 = vunpack.c.l.b16 %v1618
    %v1937 = vunpack.c.h.b16 %v1618
    %v1938 = vunpack.c.l.b16 %v1619
    %v1939 = vunpack.c.h.b16 %v1619
    %v1940 = vunpack.c.l.b16 %v1620
    %v1941 = vunpack.c.h.b16 %v1620
    %v1942 = vunpack.c.l.b16 %v1621
    %v1943 = vunpack.c.h.b16 %v1621
    %v1944 = vunpack.c.l.b16 %v1622
    %v1945 = vunpack.c.h.b16 %v1622
    %v1946 = vunpack.c.l.b16 %v1623
    %v1947 = vunpack.c.h.b16 %v1623
    %v1948 = vunpack.c.l.b16 %v1624
    %v1949 = vunpack.c.h.b16 %v1624
    %v1950 = vunpack.c.l.b16 %v1625
    %v1951 = vunpack.c.h.b16 %v1625
    %v1952 = vunpack.c.l.b16 %v1626
    %v1953 = vunpack.c.h.b16 %v1626
    %v1954 = vunpack.c.l.b16 %v1627
    %v1955 = vunpack.c.h.b16 %v1627
    %v1956 = vunpack.c.l.b16 %v1628
    %v1957 = vunpack.c.h.b16 %v1628
    %v1958 = vunpack.c.l.b16 %v1629
    %v1959 = vunpack.c.h.b16 %v1629
    %v1960 = vunpack.c.l.b16 %v1630
    %v1961 = vunpack.c.h.b16 %v1630
    %v1962 = vunpack.c.l.b16 %v1631
    %v1963 = vunpack.c.h.b16 %v1631
    %v1964 = vunpack.c.l.b16 %v1632
    %v1965 = vunpack.c.h.b16 %v1632
    %v1966 = vunpack.c.l.b16 %v1633
    %v1967 = vunpack.c.h.b16 %v1633
    %v1968 = vunpack.c.l.b16 %v1634
    %v1969 = vunpack.c.h.b16 %v1634
    %v1970 = vunpack.c.l.b16 %v1635
    %v1971 = vunpack.c.h.b16 %v1635
    %v1972 = vunpack.c.l.b16 %v1636
    %v1973 = vunpack.c.h.b16 %v1636
    %v1974 = vunpack.c.l.b16 %v1637
    %v1975 = vunpack.c.h.b16 %v1637
    %v1976 = vunpack.c.l.b16 %v1638
    %v1977 = vunpack.c.h.b16 %v1638
    %v1978 = vunpack.c.l.b16 %v1639
    %v1979 = vunpack.c.h.b16 %v1639
    %v1980 = vunpack.c.l.b16 %v1640
    %v1981 = vunpack.c.h.b16 %v1640
    %v1982 = vunpack.c.l.b16 %v1641
    %v1983 = vunpack.c.h.b16 %v1641
    %v1984 = vunpack.c.l.b16 %v1642
    %v1985 = vunpack.c.h.b16 %v1642
    %v1986 = vunpack.c.l.b16 %v1643
    %v1987 = vunpack.c.h.b16 %v1643
    %v1988 = vunpack.c.l.b16 %v1644
    %v1989 = vunpack.c.h.b16 %v1644
    %v1990 = vunpack.c.l.b16 %v1645
    %v1991 = vunpack.c.h.b16 %v1645
    %v1992 = vunpack.c.l.b16 %v1646
    %v1993 = vunpack.c.h.b16 %v1646
    %v1994 = vunpack.c.l.b16 %v1647
    %v1995 = vunpack.c.h.b16 %v1647
    %v1996 = vunpack.c.l.b16 %v1648
    %v1997 = vunpack.c.h.b16 %v1648
    %v1998 = vunpack.c.l.b16 %v1649
    %v1999 = vunpack.c.h.b16 %v1649
    %v2000 = vunpack.c.l.b16 %v1650
    %v2001 = vunpack.c.h.b16 %v1650
    %v2002 = vunpack.c.l.b16 %v1651
    %v2003 = vunpack.c.h.b16 %v1651
    %v2004 = vunpack.c.l.b16 %v1652
    %v2005 = vunpack.c.h.b16 %v1652
    %v2006 = vunpack.c.l.b16 %v1653
    %v2007 = vunpack.c.h.b16 %v1653
    %v2008 = vunpack.c.l.b16 %v1654
    %v2009 = vunpack.c.h.b16 %v1654
    %v2010 = vunpack.c.l.b16 %v1655
    %v2011 = vunpack.c.h.b16 %v1655
    %v2012 = vunpack.c.l.b16 %v1656
    %v2013 = vunpack.c.h.b16 %v1656
    %v2014 = vunpack.c.l.b16 %v1657
    %v2015 = vunpack.c.h.b16 %v1657
    %v2016 = vunpack.c.l.b16 %v1658
    %v2017 = vunpack.c.h.b16 %v1658
    %v2018 = vunpack.c.l.b16 %v1659
    %v2019 = vunpack.c.h.b16 %v1659
    %v2020 = vunpack.c.l.b16 %v1660
    %v2021 = vunpack.c.h.b16 %v1660
    %v2022 = vunpack.c.l.b16 %v1661
    %v2023 = vunpack.c.h.b16 %v1661
    %v2024 = vunpack.c.l.b16 %v1662
    %v2025 = vunpack.c.h.b16 %v1662
    %v2026 = vunpack.c.l.b16 %v1663
    %v2027 = vunpack.c.h.b16 %v1663
    %v2028 = vunpack.c.l.b16 %v1664
    %v2029 = vunpack.c.h.b16 %v1664
    %v2030 = vunpack.c.l.b16 %v1665
    %v2031 = vunpack.c.h.b16 %v1665
    %v2032 = vunpack.c.l.b16 %v1666
    %v2033 = vunpack.c.h.b16 %v1666
    %v2034 = vunpack.c.l.b16 %v1667
    %v2035 = vunpack.c.h.b16 %v1667
    %v2036 = vunpack.c.l.b16 %v1668
    %v2037 = vunpack.c.h.b16 %v1668
    %v2038 = vunpack.c.l.b16 %v1669
    %v2039 = vunpack.c.h.b16 %v1669
    %v2040 = vunpack.c.l.b16 %v1670
    %v2041 = vunpack.c.h.b16 %v1670
    %v2042 = vunpack.c.l.b16 %v1671
    %v2043 = vunpack.c.h.b16 %v1671
    %v2044 = vunpack.c.l.b16 %v1672
    %v2045 = vunpack.c.h.b16 %v1672
    %v2046 = vunpack.c.l.b16 %v1673
    %v2047 = vunpack.c.h.b16 %v1673
    %v2048 = vunpack.c.l.b16 %v1674
    %v2049 = vunpack.c.h.b16 %v1674
    %v2050 = vunpack.c.l.b16 %v1675
    %v2051 = vunpack.c.h.b16 %v1675
    %v2052 = vunpack.c.l.b16 %v1676
    %v2053 = vunpack.c.h.b16 %v1676
    %v2054 = vunpack.c.l.b16 %v1677
    %v2055 = vunpack.c.h.b16 %v1677
    %v2056 = vunpack.c.l.b16 %v1678
    %v2057 = vunpack.c.h.b16 %v1678
    %v2058 = vunpack.c.l.b16 %v1679
    %v2059 = vunpack.c.h.b16 %v1679
    %v2060 = vunpack.c.l.b16 %v1680
    %v2061 = vunpack.c.h.b16 %v1680
    %v2062 = vunpack.c.l.b16 %v1681
    %v2063 = vunpack.c.h.b16 %v1681
    %v2064 = vunpack.c.l.b16 %v1682
    %v2065 = vunpack.c.h.b16 %v1682
    %v2066 = vunpack.c.l.b16 %v1683
    %v2067 = vunpack.c.h.b16 %v1683
    %v2068 = vunpack.c.l.b16 %v1684
    %v2069 = vunpack.c.h.b16 %v1684
    %v2070 = vunpack.c.l.b16 %v1685
    %v2071 = vunpack.c.h.b16 %v1685
    %v2072 = vunpack.c.l.b16 %v1686
    %v2073 = vunpack.c.h.b16 %v1686
    %v2074 = vunpack.c.l.b16 %v1687
    %v2075 = vunpack.c.h.b16 %v1687
    %v2076 = vunpack.c.l.b16 %v1688
    %v2077 = vunpack.c.h.b16 %v1688
    %v2078 = vunpack.c.l.b16 %v1689
    %v2079 = vunpack.c.h.b16 %v1689
    %v2080 = vunpack.c.l.b16 %v1690
    %v2081 = vunpack.c.h.b16 %v1690
    %v2082 = vunpack.c.l.b16 %v1691
    %v2083 = vunpack.c.h.b16 %v1691
    %v2084 = vunpack.c.l.b16 %v1692
    %v2085 = vunpack.c.h.b16 %v1692
    %v2086 = vunpack.c.l.b16 %v1693
    %v2087 = vunpack.c.h.b16 %v1693
    %v2088 = vunpack.c.l.b16 %v1694
    %v2089 = vunpack.c.h.b16 %v1694
    %v2090 = vunpack.c.l.b16 %v1695
    %v2091 = vunpack.c.h.b16 %v1695
    %v2092 = vunpack.c.l.b16 %v1696
    %v2093 = vunpack.c.h.b16 %v1696
    %v2094 = vunpack.c.l.b16 %v1697
    %v2095 = vunpack.c.h.b16 %v1697
    %v2096 = vunpack.c.l.b16 %v1698
    %v2097 = vunpack.c.h.b16 %v1698
    %v2098 = vunpack.c.l.b16 %v1699
    %v2099 = vunpack.c.h.b16 %v1699
    %v2100 = vunpack.c.l.b16 %v1700
    %v2101 = vunpack.c.h.b16 %v1700
    %v2102 = vunpack.c.l.b16 %v1701
    %v2103 = vunpack.c.h.b16 %v1701
    %v2104 = vunpack.c.l.b16 %v1702
    %v2105 = vunpack.c.h.b16 %v1702
    %v2106 = vunpack.c.l.b16 %v1703
    %v2107 = vunpack.c.h.b16 %v1703
    %v2108 = vunpack.c.l.b16 %v1704
    %v2109 = vunpack.c.h.b16 %v1704
    %v2110 = vunpack.c.l.b16 %v1705
    %v2111 = vunpack.c.h.b16 %v1705
    %v2112 = vunpack.c.l.b16 %v1706
    %v2113 = vunpack.c.h.b16 %v1706
    %v2114 = vpack.c.b16 %v1862, %v1858
    %v2115 = vpack.c.b16 %v1863, %v1859
    %v2116 = vpack.c.b16 %v1864, %v1860
    %v2117 = vpack.c.b16 %v1865, %v1861
    %v2118 = vpack.c.b16 %v1870, %v1866
    %v2119 = vpack.c.b16 %v1871, %v1867
    %v2120 = vpack.c.b16 %v1872, %v1868
    %v2121 = vpack.c.b16 %v1873, %v1869
    %v2122 = vpack.c.b16 %v1878, %v1874
    %v2123 = vpack.c.b16 %v1879, %v1875
    %v2124 = vpack.c.b16 %v1880, %v1876
    %v2125 = vpack.c.b16 %v1881, %v1877
    %v2126 = vpack.c.b16 %v1886, %v1882
    %v2127 = vpack.c.b16 %v1887, %v1883
    %v2128 = vpack.c.b16 %v1888, %v1884
    %v2129 = vpack.c.b16 %v1889, %v1885
    %v2130 = vpack.c.b16 %v1894, %v1890
    %v2131 = vpack.c.b16 %v1895, %v1891
    %v2132 = vpack.c.b16 %v1896, %v1892
    %v2133 = vpack.c.b16 %v1897, %v1893
    %v2134 = vpack.c.b16 %v1902, %v1898
    %v2135 = vpack.c.b16 %v1903, %v1899
    %v2136 = vpack.c.b16 %v1904, %v1900
    %v2137 = vpack.c.b16 %v1905, %v1901
    %v2138 = vpack.c.b16 %v1910, %v1906
    %v2139 = vpack.c.b16 %v1911, %v1907
    %v2140 = vpack.c.b16 %v1912, %v1908
    %v2141 = vpack.c.b16 %v1913, %v1909
    %v2142 = vpack.c.b16 %v1918, %v1914
    %v2143 = vpack.c.b16 %v1919, %v1915
    %v2144 = vpack.c.b16 %v1920, %v1916
    %v2145 = vpack.c.b16 %v1921, %v1917
    %v2146 = vpack.c.b16 %v1926, %v1922
    %v2147 = vpack.c.b16 %v1927, %v1923
    %v2148 = vpack.c.b16 %v1928, %v1924
    %v2149 = vpack.c.b16 %v1929, %v1925
    %v2150 = vpack.c.b16 %v1934, %v1930
    %v2151 = vpack.c.b16 %v1935, %v1931
    %v2152 = vpack.c.b16 %v1936, %v1932
    %v2153 = vpack.c.b16 %v1937, %v1933
    %v2154 = vpack.c.b16 %v1942, %v1938
    %v2155 = vpack.c.b16 %v1943, %v1939
    %v2156 = vpack.c.b16 %v1944, %v1940
    %v2157 = vpack.c.b16 %v1945, %v1941
    %v2158 = vpack.c.b16 %v1950, %v1946
    %v2159 = vpack.c.b16 %v1951, %v1947
    %v2160 = vpack.c.b16 %v1952, %v1948
    %v2161 = vpack.c.b16 %v1953, %v1949
    %v2162 = vpack.c.b16 %v1958, %v1954
    %v2163 = vpack.c.b16 %v1959, %v1955
    %v2164 = vpack.c.b16 %v1960, %v1956
    %v2165 = vpack.c.b16 %v1961, %v1957
    %v2166 = vpack.c.b16 %v1966, %v1962
    %v2167 = vpack.c.b16 %v1967, %v1963
    %v2168 = vpack.c.b16 %v1968, %v1964
    %v2169 = vpack.c.b16 %v1969, %v1965
    %v2170 = vpack.c.b16 %v1974, %v1970
    %v2171 = vpack.c.b16 %v1975, %v1971
    %v2172 = vpack.c.b16 %v1976, %v1972
    %v2173 = vpack.c.b16 %v1977, %v1973
    %v2174 = vpack.c.b16 %v1982, %v1978
    %v2175 = vpack.c.b16 %v1983, %v1979
    %v2176 = vpack.c.b16 %v1984, %v1980
    %v2177 = vpack.c.b16 %v1985, %v1981
    %v2178 = vpack.c.b16 %v1990, %v1986
    %v2179 = vpack.c.b16 %v1991, %v1987
    %v2180 = vpack.c.b16 %v1992, %v1988
    %v2181 = vpack.c.b16 %v1993, %v1989
    %v2182 = vpack.c.b16 %v1998, %v1994
    %v2183 = vpack.c.b16 %v1999, %v1995
    %v2184 = vpack.c.b16 %v2000, %v1996
    %v2185 = vpack.c.b16 %v2001, %v1997
    %v2186 = vpack.c.b16 %v2006, %v2002
    %v2187 = vpack.c.b16 %v2007, %v2003
    %v2188 = vpack.c.b16 %v2008, %v2004
    %v2189 = vpack.c.b16 %v2009, %v2005
    %v2190 = vpack.c.b16 %v2014, %v2010
    %v2191 = vpack.c.b16 %v2015, %v2011
    %v2192 = vpack.c.b16 %v2016, %v2012
    %v2193 = vpack.c.b16 %v2017, %v2013
    %v2194 = vpack.c.b16 %v2022, %v2018
    %v2195 = vpack.c.b16 %v2023, %v2019
    %v2196 = vpack.c.b16 %v2024, %v2020
    %v2197 = vpack.c.b16 %v2025, %v2021
    %v2198 = vpack.c.b16 %v2030, %v2026
    %v2199 = vpack.c.b16 %v2031, %v2027
    %v2200 = vpack.c.b16 %v2032, %v2028
    %v2201 = vpack.c.b16 %v2033, %v2029
    %v2202 = vpack.c.b16 %v2038, %v2034
    %v2203 = vpack.c.b16 %v2039, %v2035
    %v2204 = vpack.c.b16 %v2040, %v2036
    %v2205 = vpack.c.b16 %v2041, %v2037
    %v2206 = vpack.c.b16 %v2046, %v2042
    %v2207 = vpack.c.b16 %v2047, %v2043
    %v2208 = vpack.c.b16 %v2048, %v2044
    %v2209 = vpack.c.b16 %v2049, %v2045
    %v2210 = vpack.c.b16 %v2054, %v2050
    %v2211 = vpack.c.b16 %v2055, %v2051
    %v2212 = vpack.c.b16 %v2056, %v2052
    %v2213 = vpack.c.b16 %v2057, %v2053
    %v2214 = vpack.c.b16 %v2062, %v2058
    %v2215 = vpack.c.b16 %v2063, %v2059
    %v2216 = vpack.c.b16 %v2064, %v2060
    %v2217 = vpack.c.b16 %v2065, %v2061
    %v2218 = vpack.c.b16 %v2070, %v2066
    %v2219 = vpack.c.b16 %v2071, %v2067
    %v2220 = vpack.c.b16 %v2072, %v2068
    %v2221 = vpack.c.b16 %v2073, %v2069
    %v2222 = vpack.c.b16 %v2078, %v2074
    %v2223 = vpack.c.b16 %v2079, %v2075
    %v2224 = vpack.c.b16 %v2080, %v2076
    %v2225 = vpack.c.b16 %v2081, %v2077
    %v2226 = vpack.c.b16 %v2086, %v2082
    %v2227 = vpack.c.b16 %v2087, %v2083
    %v2228 = vpack.c.b16 %v2088, %v2084
    %v2229 = vpack.c.b16 %v2089, %v2085
    %v2230 = vpack.c.b16 %v2094, %v2090
    %v2231 = vpack.c.b16 %v2095, %v2091
    %v2232 = vpack.c.b16 %v2096, %v2092
    %v2233 = vpack.c.b16 %v2097, %v2093
    %v2234 = vpack.c.b16 %v2102, %v2098
    %v2235 = vpack.c.b16 %v2103, %v2099
    %v2236 = vpack.c.b16 %v2104, %v2100
    %v2237 = vpack.c.b16 %v2105, %v2101
    %v2238 = vpack.c.b16 %v2110, %v2106
    %v2239 = vpack.c.b16 %v2111, %v2107
    %v2240 = vpack.c.b16 %v2112, %v2108
    %v2241 = vpack.c.b16 %v2113, %v2109
    %2370 = vmatprep.subr.bf16.mxu0 %v2143
    %2371 = vmatpush1.bf16.msra.mxu0 %v2142
    %2372 = vmatprep.subr.bf16.mxu0 %v2139
    %2373 = vmatpush1.bf16.msra.mxu0 %v2138
    %2374 = vmatprep.subr.bf16.mxu0 %v2135
    %2375 = vmatpush1.bf16.msra.mxu0 %v2134
    %2376 = vmatprep.subr.bf16.mxu0 %v2131
    %2377 = vmatpush1.bf16.msra.mxu0 %v2130
    %2378 = vmatprep.subr.bf16.mxu0 %v2127
    %2379 = vmatpush1.bf16.msra.mxu0 %v2126
    %2380 = vmatprep.subr.bf16.mxu0 %v2123
    %2381 = vmatpush1.bf16.msra.mxu0 %v2122
    %2382 = vmatprep.subr.bf16.mxu0 %v2119
    %2383 = vmatpush1.bf16.msra.mxu0 %v2118
    %2384 = vmatprep.subr.bf16.mxu0 %v2115
    %2385 = vmatpush1.bf16.msra.mxu0 %v2114
    %2386 = vmatprep.subr.bf16.mxu0 %v2175
    %2387 = vmatpush2.bf16.msra.mxu0 %v2174
    %2388 = vmatprep.subr.bf16.mxu0 %v2171
    %2389 = vmatpush2.bf16.msra.mxu0 %v2170
    %2390 = vmatprep.subr.bf16.mxu0 %v2167
    %2391 = vmatpush2.bf16.msra.mxu0 %v2166
    %2392 = vmatprep.subr.bf16.mxu0 %v2163
    %2393 = vmatpush2.bf16.msra.mxu0 %v2162
    %2394 = vmatprep.subr.bf16.mxu0 %v2159
    %2395 = vmatpush2.bf16.msra.mxu0 %v2158
    %2396 = vmatprep.subr.bf16.mxu0 %v2155
    %2397 = vmatpush2.bf16.msra.mxu0 %v2154
    %2398 = vmatprep.subr.bf16.mxu0 %v2151
    %2399 = vmatpush2.bf16.msra.mxu0 %v2150
    %2400 = vmatprep.subr.bf16.mxu0 %v2147
    %2401 = vmatpush2.bf16.msra.mxu0 %v2146
    %2402 = vmatprep.mubr.bf16.mxu0 %v1575
    %2403 = vmatmul.mubr.bf16.gmra.mxu0 %v1574
    %v2404 = vpop.f32.mrf.mxu0
    %v2405 = vadd.f32 %v1713, %v2404
    %v2406 = vpop.f32.mrf.mxu0
    %v2407 = vadd.f32 %v1717, %v2406
    %v2408 = vpop.f32.mrf.mxu0
    %v2409 = vpop.f32.mrf.mxu0
    %2410 = vdwg.mxu0
    %2411 = vmatprep.subr.bf16.mxu0 %v2207
    %2412 = vmatpush1.bf16.msra.mxu0 %v2206
    %2413 = vmatprep.subr.bf16.mxu0 %v2203
    %2414 = vmatpush1.bf16.msra.mxu0 %v2202
    %2415 = vmatprep.subr.bf16.mxu0 %v2199
    %2416 = vmatpush1.bf16.msra.mxu0 %v2198
    %2417 = vmatprep.subr.bf16.mxu0 %v2195
    %2418 = vmatpush1.bf16.msra.mxu0 %v2194
    %2419 = vmatprep.subr.bf16.mxu0 %v2191
    %2420 = vmatpush1.bf16.msra.mxu0 %v2190
    %2421 = vmatprep.subr.bf16.mxu0 %v2187
    %2422 = vmatpush1.bf16.msra.mxu0 %v2186
    %2423 = vmatprep.subr.bf16.mxu0 %v2183
    %2424 = vmatpush1.bf16.msra.mxu0 %v2182
    %2425 = vmatprep.subr.bf16.mxu0 %v2179
    %2426 = vmatpush1.bf16.msra.mxu0 %v2178
    %2427 = vmatprep.subr.bf16.mxu0 %v2239
    %2428 = vmatpush2.bf16.msra.mxu0 %v2238
    %2429 = vmatprep.subr.bf16.mxu0 %v2235
    %2430 = vmatpush2.bf16.msra.mxu0 %v2234
    %2431 = vmatprep.subr.bf16.mxu0 %v2231
    %2432 = vmatpush2.bf16.msra.mxu0 %v2230
    %2433 = vmatprep.subr.bf16.mxu0 %v2227
    %2434 = vmatpush2.bf16.msra.mxu0 %v2226
    %2435 = vmatprep.subr.bf16.mxu0 %v2223
    %2436 = vmatpush2.bf16.msra.mxu0 %v2222
    %2437 = vmatprep.subr.bf16.mxu0 %v2219
    %2438 = vmatpush2.bf16.msra.mxu0 %v2218
    %2439 = vmatprep.subr.bf16.mxu0 %v2215
    %2440 = vmatpush2.bf16.msra.mxu0 %v2214
    %2441 = vmatprep.subr.bf16.mxu0 %v2211
    %2442 = vmatpush2.bf16.msra.mxu0 %v2210
    %2443 = vmatprep.mubr.bf16.mxu0 %v1577
    %2444 = vmatmul.mubr.bf16.gmra.mxu0 %v1576
    %v2445 = vpop.f32.mrf.mxu0
    %v2446 = vadd.f32 %v2405, %v2445
    %v2447 = vpop.f32.mrf.mxu0
    %v2448 = vadd.f32 %v2407, %v2447
    %v2449 = vpop.f32.mrf.mxu0
    %v2450 = vpop.f32.mrf.mxu0
    %2451 = vdwg.mxu0
    %2452 = vmatprep.subr.bf16.mxu0 %v2145
    %2453 = vmatpush1.bf16.msra.mxu0 %v2144
    %2454 = vmatprep.subr.bf16.mxu0 %v2141
    %2455 = vmatpush1.bf16.msra.mxu0 %v2140
    %2456 = vmatprep.subr.bf16.mxu0 %v2137
    %2457 = vmatpush1.bf16.msra.mxu0 %v2136
    %2458 = vmatprep.subr.bf16.mxu0 %v2133
    %2459 = vmatpush1.bf16.msra.mxu0 %v2132
    %2460 = vmatprep.subr.bf16.mxu0 %v2129
    %2461 = vmatpush1.bf16.msra.mxu0 %v2128
    %2462 = vmatprep.subr.bf16.mxu0 %v2125
    %2463 = vmatpush1.bf16.msra.mxu0 %v2124
    %2464 = vmatprep.subr.bf16.mxu0 %v2121
    %2465 = vmatpush1.bf16.msra.mxu0 %v2120
    %2466 = vmatprep.subr.bf16.mxu0 %v2117
    %2467 = vmatpush1.bf16.msra.mxu0 %v2116
    %2468 = vmatprep.subr.bf16.mxu0 %v2177
    %2469 = vmatpush2.bf16.msra.mxu0 %v2176
    %2470 = vmatprep.subr.bf16.mxu0 %v2173
    %2471 = vmatpush2.bf16.msra.mxu0 %v2172
    %2472 = vmatprep.subr.bf16.mxu0 %v2169
    %2473 = vmatpush2.bf16.msra.mxu0 %v2168
    %2474 = vmatprep.subr.bf16.mxu0 %v2165
    %2475 = vmatpush2.bf16.msra.mxu0 %v2164
    %2476 = vmatprep.subr.bf16.mxu0 %v2161
    %2477 = vmatpush2.bf16.msra.mxu0 %v2160
    %2478 = vmatprep.subr.bf16.mxu0 %v2157
    %2479 = vmatpush2.bf16.msra.mxu0 %v2156
    %2480 = vmatprep.subr.bf16.mxu0 %v2153
    %2481 = vmatpush2.bf16.msra.mxu0 %v2152
    %2482 = vmatprep.subr.bf16.mxu0 %v2149
    %2483 = vmatpush2.bf16.msra.mxu0 %v2148
    %2484 = vmatprep.mubr.bf16.mxu0 %v1575
    %2485 = vmatmul.mubr.bf16.gmra.mxu0 %v1574
    %v2486 = vpop.f32.mrf.mxu0
    %v2487 = vadd.f32 %v1721, %v2486
    %v2488 = vpop.f32.mrf.mxu0
    %v2489 = vadd.f32 %v1725, %v2488
    %v2490 = vpop.f32.mrf.mxu0
    %v2491 = vpop.f32.mrf.mxu0
    %2492 = vdwg.mxu0
    %2493 = vmatprep.subr.bf16.mxu0 %v2209
    %2494 = vmatpush1.bf16.msra.mxu0 %v2208
    %2495 = vmatprep.subr.bf16.mxu0 %v2205
    %2496 = vmatpush1.bf16.msra.mxu0 %v2204
    %2497 = vmatprep.subr.bf16.mxu0 %v2201
    %2498 = vmatpush1.bf16.msra.mxu0 %v2200
    %2499 = vmatprep.subr.bf16.mxu0 %v2197
    %2500 = vmatpush1.bf16.msra.mxu0 %v2196
    %2501 = vmatprep.subr.bf16.mxu0 %v2193
    %2502 = vmatpush1.bf16.msra.mxu0 %v2192
    %2503 = vmatprep.subr.bf16.mxu0 %v2189
    %2504 = vmatpush1.bf16.msra.mxu0 %v2188
    %2505 = vmatprep.subr.bf16.mxu0 %v2185
    %2506 = vmatpush1.bf16.msra.mxu0 %v2184
    %2507 = vmatprep.subr.bf16.mxu0 %v2181
    %2508 = vmatpush1.bf16.msra.mxu0 %v2180
    %2509 = vmatprep.subr.bf16.mxu0 %v2241
    %2510 = vmatpush2.bf16.msra.mxu0 %v2240
    %2511 = vmatprep.subr.bf16.mxu0 %v2237
    %2512 = vmatpush2.bf16.msra.mxu0 %v2236
    %2513 = vmatprep.subr.bf16.mxu0 %v2233
    %2514 = vmatpush2.bf16.msra.mxu0 %v2232
    %2515 = vmatprep.subr.bf16.mxu0 %v2229
    %2516 = vmatpush2.bf16.msra.mxu0 %v2228
    %2517 = vmatprep.subr.bf16.mxu0 %v2225
    %2518 = vmatpush2.bf16.msra.mxu0 %v2224
    %2519 = vmatprep.subr.bf16.mxu0 %v2221
    %2520 = vmatpush2.bf16.msra.mxu0 %v2220
    %2521 = vmatprep.subr.bf16.mxu0 %v2217
    %2522 = vmatpush2.bf16.msra.mxu0 %v2216
    %2523 = vmatprep.subr.bf16.mxu0 %v2213
    %2524 = vmatpush2.bf16.msra.mxu0 %v2212
    %2525 = vmatprep.mubr.bf16.mxu0 %v1577
    %2526 = vmatmul.mubr.bf16.gmra.mxu0 %v1576
    %v2527 = vpop.f32.mrf.mxu0
    %v2528 = vadd.f32 %v2487, %v2527
    %v2529 = vpop.f32.mrf.mxu0
    %v2530 = vadd.f32 %v2489, %v2529
    %v2531 = vpop.f32.mrf.mxu0
    %v2532 = vpop.f32.mrf.mxu0
    %2533 = vdwg.mxu0
    %v2534 = vmax.f32 %v1486, 0.0
    %v2535 = vmax.f32 %v1488, 0.0
    %v2536 = vmax.f32 %v1568, 0.0
    %v2537 = vmax.f32 %v1570, 0.0
    %v2538 = vmax.f32 %v2446, 0.0
    %v2539 = vmax.f32 %v2448, 0.0
    %v2540 = vmax.f32 %v2528, 0.0
    %v2541 = vmax.f32 %v2530, 0.0
    %v2542 = vpack.c.bf16 %v2538, %v2534
    %v2543 = vpack.c.bf16 %v2539, %v2535
    %v2544 = vpack.c.bf16 %v2540, %v2536
    %v2545 = vpack.c.bf16 %v2541, %v2537
    %v2546 = vld [vmem:[%s5] sm:$0xf]
    %v2547 = vld [vmem:[%s5 + $0x4] sm:$0xf]
    %v2548 = vld [vmem:[%s5 + $0x8] sm:$0xf]
    %v2549 = vld [vmem:[%s5 + $0xc] sm:$0xf]
    %v2550 = vld [vmem:[%s5 + $0x10] sm:$0xf]
    %v2551 = vld [vmem:[%s5 + $0x14] sm:$0xf]
    %v2552 = vld [vmem:[%s5 + $0x18] sm:$0xf]
    %v2553 = vld [vmem:[%s5 + $0x1c] sm:$0xf]
    %v2554 = vld [vmem:[%s5 + $0x20] sm:$0xf]
    %v2555 = vld [vmem:[%s5 + $0x24] sm:$0xf]
    %v2556 = vld [vmem:[%s5 + $0x28] sm:$0xf]
    %v2557 = vld [vmem:[%s5 + $0x2c] sm:$0xf]
    %v2558 = vld [vmem:[%s5 + $0x30] sm:$0xf]
    %v2559 = vld [vmem:[%s5 + $0x34] sm:$0xf]
    %v2560 = vld [vmem:[%s5 + $0x38] sm:$0xf]
    %v2561 = vld [vmem:[%s5 + $0x3c] sm:$0xf]
    %v2562 = vld [vmem:[%s5 + $0x40] sm:$0xf]
    %v2563 = vld [vmem:[%s5 + $0x44] sm:$0xf]
    %v2564 = vld [vmem:[%s5 + $0x48] sm:$0xf]
    %v2565 = vld [vmem:[%s5 + $0x4c] sm:$0xf]
    %v2566 = vld [vmem:[%s5 + $0x50] sm:$0xf]
    %v2567 = vld [vmem:[%s5 + $0x54] sm:$0xf]
    %v2568 = vld [vmem:[%s5 + $0x58] sm:$0xf]
    %v2569 = vld [vmem:[%s5 + $0x5c] sm:$0xf]
    %v2570 = vld [vmem:[%s5 + $0x60] sm:$0xf]
    %v2571 = vld [vmem:[%s5 + $0x64] sm:$0xf]
    %v2572 = vld [vmem:[%s5 + $0x68] sm:$0xf]
    %v2573 = vld [vmem:[%s5 + $0x6c] sm:$0xf]
    %v2574 = vld [vmem:[%s5 + $0x70] sm:$0xf]
    %v2575 = vld [vmem:[%s5 + $0x74] sm:$0xf]
    %v2576 = vld [vmem:[%s5 + $0x78] sm:$0xf]
    %v2577 = vld [vmem:[%s5 + $0x7c] sm:$0xf]
    %v2578 = vld [vmem:[%s5 + $0x80] sm:$0xf]
    %v2579 = vld [vmem:[%s5 + $0x84] sm:$0xf]
    %v2580 = vld [vmem:[%s5 + $0x88] sm:$0xf]
    %v2581 = vld [vmem:[%s5 + $0x8c] sm:$0xf]
    %v2582 = vld [vmem:[%s5 + $0x90] sm:$0xf]
    %v2583 = vld [vmem:[%s5 + $0x94] sm:$0xf]
    %v2584 = vld [vmem:[%s5 + $0x98] sm:$0xf]
    %v2585 = vld [vmem:[%s5 + $0x9c] sm:$0xf]
    %v2586 = vld [vmem:[%s5 + $0xa0] sm:$0xf]
    %v2587 = vld [vmem:[%s5 + $0xa4] sm:$0xf]
    %v2588 = vld [vmem:[%s5 + $0xa8] sm:$0xf]
    %v2589 = vld [vmem:[%s5 + $0xac] sm:$0xf]
    %v2590 = vld [vmem:[%s5 + $0xb0] sm:$0xf]
    %v2591 = vld [vmem:[%s5 + $0xb4] sm:$0xf]
    %v2592 = vld [vmem:[%s5 + $0xb8] sm:$0xf]
    %v2593 = vld [vmem:[%s5 + $0xbc] sm:$0xf]
    %v2594 = vld [vmem:[%s5 + $0xc0] sm:$0xf]
    %v2595 = vld [vmem:[%s5 + $0xc4] sm:$0xf]
    %v2596 = vld [vmem:[%s5 + $0xc8] sm:$0xf]
    %v2597 = vld [vmem:[%s5 + $0xcc] sm:$0xf]
    %v2598 = vld [vmem:[%s5 + $0xd0] sm:$0xf]
    %v2599 = vld [vmem:[%s5 + $0xd4] sm:$0xf]
    %v2600 = vld [vmem:[%s5 + $0xd8] sm:$0xf]
    %v2601 = vld [vmem:[%s5 + $0xdc] sm:$0xf]
    %v2602 = vld [vmem:[%s5 + $0xe0] sm:$0xf]
    %v2603 = vld [vmem:[%s5 + $0xe4] sm:$0xf]
    %v2604 = vld [vmem:[%s5 + $0xe8] sm:$0xf]
    %v2605 = vld [vmem:[%s5 + $0xec] sm:$0xf]
    %v2606 = vld [vmem:[%s5 + $0xf0] sm:$0xf]
    %v2607 = vld [vmem:[%s5 + $0xf4] sm:$0xf]
    %v2608 = vld [vmem:[%s5 + $0xf8] sm:$0xf]
    %v2609 = vld [vmem:[%s5 + $0xfc] sm:$0xf]
    %v2610 = vld [vmem:[%s7] sm:$0x1]
    %v2612 = vlaneseq
    %v2613 = vshrl.u32 %v2612, 7
    %v2614 = vsub.s32 0, %v2613
    %v2615 = vrot.slane %v2610, %v2614
    %v2681 = vunpack.c.l.b16 %v2546
    %v2682 = vunpack.c.l.b16 %v2547
    %v2683 = vunpack.c.l.b16 %v2548
    %v2684 = vunpack.c.l.b16 %v2549
    %v2685 = vunpack.c.l.b16 %v2550
    %v2686 = vunpack.c.l.b16 %v2551
    %v2687 = vunpack.c.l.b16 %v2552
    %v2688 = vunpack.c.l.b16 %v2553
    %v2689 = vunpack.c.l.b16 %v2554
    %v2690 = vunpack.c.l.b16 %v2555
    %v2691 = vunpack.c.l.b16 %v2556
    %v2692 = vunpack.c.l.b16 %v2557
    %v2693 = vunpack.c.l.b16 %v2558
    %v2694 = vunpack.c.l.b16 %v2559
    %v2695 = vunpack.c.l.b16 %v2560
    %v2696 = vunpack.c.l.b16 %v2561
    %v2697 = vunpack.c.l.b16 %v2562
    %v2698 = vunpack.c.l.b16 %v2563
    %v2699 = vunpack.c.l.b16 %v2564
    %v2700 = vunpack.c.l.b16 %v2565
    %v2701 = vunpack.c.l.b16 %v2566
    %v2702 = vunpack.c.l.b16 %v2567
    %v2703 = vunpack.c.l.b16 %v2568
    %v2704 = vunpack.c.l.b16 %v2569
    %v2705 = vunpack.c.l.b16 %v2570
    %v2706 = vunpack.c.l.b16 %v2571
    %v2707 = vunpack.c.l.b16 %v2572
    %v2708 = vunpack.c.l.b16 %v2573
    %v2709 = vunpack.c.l.b16 %v2574
    %v2710 = vunpack.c.l.b16 %v2575
    %v2711 = vunpack.c.l.b16 %v2576
    %v2712 = vunpack.c.l.b16 %v2577
    %v2713 = vunpack.c.l.b16 %v2578
    %v2714 = vunpack.c.l.b16 %v2579
    %v2715 = vunpack.c.l.b16 %v2580
    %v2716 = vunpack.c.l.b16 %v2581
    %v2717 = vunpack.c.l.b16 %v2582
    %v2718 = vunpack.c.l.b16 %v2583
    %v2719 = vunpack.c.l.b16 %v2584
    %v2720 = vunpack.c.l.b16 %v2585
    %v2721 = vunpack.c.l.b16 %v2586
    %v2722 = vunpack.c.l.b16 %v2587
    %v2723 = vunpack.c.l.b16 %v2588
    %v2724 = vunpack.c.l.b16 %v2589
    %v2725 = vunpack.c.l.b16 %v2590
    %v2726 = vunpack.c.l.b16 %v2591
    %v2727 = vunpack.c.l.b16 %v2592
    %v2728 = vunpack.c.l.b16 %v2593
    %v2729 = vunpack.c.l.b16 %v2594
    %v2730 = vunpack.c.l.b16 %v2595
    %v2731 = vunpack.c.l.b16 %v2596
    %v2732 = vunpack.c.l.b16 %v2597
    %v2733 = vunpack.c.l.b16 %v2598
    %v2734 = vunpack.c.l.b16 %v2599
    %v2735 = vunpack.c.l.b16 %v2600
    %v2736 = vunpack.c.l.b16 %v2601
    %v2737 = vunpack.c.l.b16 %v2602
    %v2738 = vunpack.c.l.b16 %v2603
    %v2739 = vunpack.c.l.b16 %v2604
    %v2740 = vunpack.c.l.b16 %v2605
    %v2741 = vunpack.c.l.b16 %v2606
    %v2742 = vunpack.c.l.b16 %v2607
    %v2743 = vunpack.c.l.b16 %v2608
    %v2744 = vunpack.c.l.b16 %v2609
    %v2745 = vpack.c.b16 %v2682, %v2681
    %v2746 = vpack.c.b16 %v2684, %v2683
    %v2747 = vpack.c.b16 %v2686, %v2685
    %v2748 = vpack.c.b16 %v2688, %v2687
    %v2749 = vpack.c.b16 %v2690, %v2689
    %v2750 = vpack.c.b16 %v2692, %v2691
    %v2751 = vpack.c.b16 %v2694, %v2693
    %v2752 = vpack.c.b16 %v2696, %v2695
    %v2753 = vpack.c.b16 %v2698, %v2697
    %v2754 = vpack.c.b16 %v2700, %v2699
    %v2755 = vpack.c.b16 %v2702, %v2701
    %v2756 = vpack.c.b16 %v2704, %v2703
    %v2757 = vpack.c.b16 %v2706, %v2705
    %v2758 = vpack.c.b16 %v2708, %v2707
    %v2759 = vpack.c.b16 %v2710, %v2709
    %v2760 = vpack.c.b16 %v2712, %v2711
    %v2761 = vpack.c.b16 %v2714, %v2713
    %v2762 = vpack.c.b16 %v2716, %v2715
    %v2763 = vpack.c.b16 %v2718, %v2717
    %v2764 = vpack.c.b16 %v2720, %v2719
    %v2765 = vpack.c.b16 %v2722, %v2721
    %v2766 = vpack.c.b16 %v2724, %v2723
    %v2767 = vpack.c.b16 %v2726, %v2725
    %v2768 = vpack.c.b16 %v2728, %v2727
    %v2769 = vpack.c.b16 %v2730, %v2729
    %v2770 = vpack.c.b16 %v2732, %v2731
    %v2771 = vpack.c.b16 %v2734, %v2733
    %v2772 = vpack.c.b16 %v2736, %v2735
    %v2773 = vpack.c.b16 %v2738, %v2737
    %v2774 = vpack.c.b16 %v2740, %v2739
    %v2775 = vpack.c.b16 %v2742, %v2741
    %v2776 = vpack.c.b16 %v2744, %v2743
    %2809 = vmatprep.subr.bf16.mxu0 0
    %2810 = vmatpush1.bf16.msra.mxu0 %v2752
    %2811 = vmatprep.subr.bf16.mxu0 0
    %2812 = vmatpush1.bf16.msra.mxu0 %v2751
    %2813 = vmatprep.subr.bf16.mxu0 0
    %2814 = vmatpush1.bf16.msra.mxu0 %v2750
    %2815 = vmatprep.subr.bf16.mxu0 0
    %2816 = vmatpush1.bf16.msra.mxu0 %v2749
    %2817 = vmatprep.subr.bf16.mxu0 0
    %2818 = vmatpush1.bf16.msra.mxu0 %v2748
    %2819 = vmatprep.subr.bf16.mxu0 0
    %2820 = vmatpush1.bf16.msra.mxu0 %v2747
    %2821 = vmatprep.subr.bf16.mxu0 0
    %2822 = vmatpush1.bf16.msra.mxu0 %v2746
    %2823 = vmatprep.subr.bf16.mxu0 0
    %2824 = vmatpush1.bf16.msra.mxu0 %v2745
    %2825 = vmatprep.subr.bf16.mxu0 0
    %2826 = vmatpush2.bf16.msra.mxu0 %v2760
    %2827 = vmatprep.subr.bf16.mxu0 0
    %2828 = vmatpush2.bf16.msra.mxu0 %v2759
    %2829 = vmatprep.subr.bf16.mxu0 0
    %2830 = vmatpush2.bf16.msra.mxu0 %v2758
    %2831 = vmatprep.subr.bf16.mxu0 0
    %2832 = vmatpush2.bf16.msra.mxu0 %v2757
    %2833 = vmatprep.subr.bf16.mxu0 0
    %2834 = vmatpush2.bf16.msra.mxu0 %v2756
    %2835 = vmatprep.subr.bf16.mxu0 0
    %2836 = vmatpush2.bf16.msra.mxu0 %v2755
    %2837 = vmatprep.subr.bf16.mxu0 0
    %2838 = vmatpush2.bf16.msra.mxu0 %v2754
    %2839 = vmatprep.subr.bf16.mxu0 0
    %2840 = vmatpush2.bf16.msra.mxu0 %v2753
    %2841 = vmatprep.mubr.bf16.mxu0 %v2543
    %2842 = vmatmul.mubr.bf16.gmra.mxu0 %v2542
    %v2843 = vpop.f32.mrf.mxu0
    %v2844 = vadd.f32 %v2615, %v2843
    %v2845 = vpop.f32.mrf.mxu0
    %v2846 = vpop.f32.mrf.mxu0
    %v2847 = vadd.f32 %v2615, %v2846
    %v2848 = vpop.f32.mrf.mxu0
    %2849 = vdwg.mxu0
    %2850 = vmatprep.subr.bf16.mxu0 0
    %2851 = vmatpush1.bf16.msra.mxu0 %v2768
    %2852 = vmatprep.subr.bf16.mxu0 0
    %2853 = vmatpush1.bf16.msra.mxu0 %v2767
    %2854 = vmatprep.subr.bf16.mxu0 0
    %2855 = vmatpush1.bf16.msra.mxu0 %v2766
    %2856 = vmatprep.subr.bf16.mxu0 0
    %2857 = vmatpush1.bf16.msra.mxu0 %v2765
    %2858 = vmatprep.subr.bf16.mxu0 0
    %2859 = vmatpush1.bf16.msra.mxu0 %v2764
    %2860 = vmatprep.subr.bf16.mxu0 0
    %2861 = vmatpush1.bf16.msra.mxu0 %v2763
    %2862 = vmatprep.subr.bf16.mxu0 0
    %2863 = vmatpush1.bf16.msra.mxu0 %v2762
    %2864 = vmatprep.subr.bf16.mxu0 0
    %2865 = vmatpush1.bf16.msra.mxu0 %v2761
    %2866 = vmatprep.subr.bf16.mxu0 0
    %2867 = vmatpush2.bf16.msra.mxu0 %v2776
    %2868 = vmatprep.subr.bf16.mxu0 0
    %2869 = vmatpush2.bf16.msra.mxu0 %v2775
    %2870 = vmatprep.subr.bf16.mxu0 0
    %2871 = vmatpush2.bf16.msra.mxu0 %v2774
    %2872 = vmatprep.subr.bf16.mxu0 0
    %2873 = vmatpush2.bf16.msra.mxu0 %v2773
    %2874 = vmatprep.subr.bf16.mxu0 0
    %2875 = vmatpush2.bf16.msra.mxu0 %v2772
    %2876 = vmatprep.subr.bf16.mxu0 0
    %2877 = vmatpush2.bf16.msra.mxu0 %v2771
    %2878 = vmatprep.subr.bf16.mxu0 0
    %2879 = vmatpush2.bf16.msra.mxu0 %v2770
    %2880 = vmatprep.subr.bf16.mxu0 0
    %2881 = vmatpush2.bf16.msra.mxu0 %v2769
    %2882 = vmatprep.mubr.bf16.mxu0 %v2545
    %2883 = vmatmul.mubr.bf16.gmra.mxu0 %v2544
    %v2884 = vpop.f32.mrf.mxu0
    %v2885 = vadd.f32 %v2844, %v2884
    %v2886 = vpop.f32.mrf.mxu0
    %v2887 = vpop.f32.mrf.mxu0
    %v2888 = vadd.f32 %v2847, %v2887
    %v2889 = vpop.f32.mrf.mxu0
    %2890 = vdwg.mxu0
    %v2891 = vlaneseq
    %v2892 = vand.u32 %v2891, 127
    %vm2893 = vcmp.eq.s32.totalorder %v2892, 0
    %v2894 = vsel %vm2893, %v2885, %v2888
    %2895 = vst.msk [vmem:[%s8] sm:$0xff] %vm111, %v2894
    // Predicated region
    $region38: #{critic_forward.1} parent=1 // pred_check
      _
    $region39: #{critic_forward.1} parent=1 // pred_check_branch
      %2897 = sbr.rel (0) target = $region41
    $region40: #{critic_forward.1} parent=1 // pred_region
      _
    $region41: #{critic_forward.1} parent=1 // pred_fallthru
      _
    // Predicated region
    $region42: #{critic_forward.1} parent=1 // pred_check
      _
    $region43: #{critic_forward.1} parent=1 // pred_check_branch
      %2899 = sbr.rel (0) target = $region45
    $region44: #{critic_forward.1} parent=1 // pred_region
      _
    $region45: #{critic_forward.1} parent=1 // pred_fallthru
      _
    %2900 = vsyncpa [#allocation3], 1

</llo_original>
